<compile_context>
chip_gen: v6e
topology: v6e:2x2x1
jax: 0.10.0
libtpu: 0.0.40
codegen_flags: <defaults>
</compile_context>

<pallas_src>
import jax
import jax.numpy as jnp
from jax import lax
from jax.experimental import pallas as pl
from jax.experimental.pallas import tpu as pltpu

# ---------------------------------------------------------------- hyperparams
B = 2            # batch_size
MAX_LAYER = 3    # max_layer (hops)
S = 16           # subgraph_size
N = B * MAX_LAYER * S          # total nodes = 96
IN_DIM = 32                    # input_dim
HEAD = 3                       # heads (hard-coded 3 in build_traverse_subgat_layer)
K = 16                         # per-head dim
EMB = HEAD * K                 # embedding_dim = 48
EPG = 24                       # edges per graph
E = B * EPG                    # total edges = 48
NEG_SLOPE_ATT = 0.2
NEG_SLOPE_ACT = 0.1
BN_EPS = 1e-5


# --------------------------------------------------------------- fused kernel
def fused_traverse_kernel(subx_ref, wt_ref, gdst_ref, gsrc_ref, sdst_ref,
                          ai_ref, aj_ref, hsum_ref, same_ref, maske_ref,
                          bias_ref, gamma_ref, beta_ref, lmean_ref, o_ref):
    f32 = jnp.float32
    # 1. weight_linear:  h = subx @ W^T
    h = jnp.dot(subx_ref[...], wt_ref[...], preferred_element_type=f32)      # (N, EMB)

    # 2. endpoint gathers as one-hot matmuls (x_i = h[dst], x_j = h[src])
    x_i = jnp.dot(gdst_ref[...], h, preferred_element_type=f32)              # (E, EMB)
    x_j = jnp.dot(gsrc_ref[...], h, preferred_element_type=f32)              # (E, EMB)

    # 3. attention logits: (cat([x_i,x_j],-1) * att).sum(-1) per head, kept
    #    replicated across each head's K lanes; leaky_relu(0.2)
    prod = x_i * ai_ref[...] + x_j * aj_ref[...]                             # (E, EMB)
    s = jnp.dot(prod, hsum_ref[...], preferred_element_type=f32)             # (E, EMB)
    s = jnp.where(s > 0, s, NEG_SLOPE_ATT * s)

    # 4. softmax grouped by edge_index[0] (src); global per-head max is an
    #    equivalent shift (softmax is shift-invariant within each group)
    gmax = jnp.max(s, axis=0, keepdims=True)                                 # (1, EMB)
    ex = jnp.exp(s - gmax)                                                   # (E, EMB)
    denom = jnp.dot(same_ref[...], ex, preferred_element_type=f32)           # (E, EMB)
    alpha = ex / (denom + 1e-16)

    # 5. masked, attention-weighted messages
    msg = x_j * maske_ref[...] * alpha                                       # (E, EMB)

    # 6. aggr='add' at edge_index[1] as a one-hot^T matmul
    aggr = jnp.dot(sdst_ref[...], msg, preferred_element_type=f32)           # (N, EMB)

    # 7. update(): + bias ; act2: LeakyReLU(0.1)
    y = aggr + bias_ref[...]
    y = jnp.where(y > 0, y, NEG_SLOPE_ACT * y)

    # 8. BatchNorm1d (training-mode batch stats, centered variance) + layer mean
    mu = jnp.mean(y, axis=0, keepdims=True)                                  # (1, EMB)
    d = y - mu
    var = jnp.mean(d * d, axis=0, keepdims=True)
    inv = lax.rsqrt(var + BN_EPS)
    yn = d * inv * gamma_ref[...] + beta_ref[...]                            # (N, EMB)

    # mean over max_layer as a precomputed (B*S, N) averaging matmul
    o_ref[...] = jnp.dot(lmean_ref[...], yn, preferred_element_type=f32)     # (B*S, EMB)


def _full_spec(shape):
    return pl.BlockSpec(shape, lambda i: (0,) * len(shape))


# ------------------------------------------------------------------- forward
def traverse_subgnn_forward(subx, edge_index, mask, params,
                            batch_size, max_layer, subgraph_size):
    n = subx.shape[0]
    e = edge_index.shape[1]
    emb = params["Wt"].shape[1]
    src, dst = edge_index[0], edge_index[1]

    # static-per-edge_index matrices (built once in the wrapper)
    node_ids = jnp.arange(n)
    gather_dst = (dst[:, None] == node_ids[None, :]).astype(jnp.float32)     # (E, N)
    gather_src = (src[:, None] == node_ids[None, :]).astype(jnp.float32)     # (E, N)
    scatter_dst = gather_dst.T                                               # (N, E)
    same_src = (src[:, None] == src[None, :]).astype(jnp.float32)            # (E, E)
    mask_e = jnp.broadcast_to(mask.astype(jnp.float32), (e, emb))            # (E, EMB)

    # mean-over-max_layer averaging matrix (B*S, N)
    bs = batch_size * subgraph_size
    rows = jnp.arange(bs)
    rb, rs = rows // subgraph_size, rows % subgraph_size
    cols = jnp.arange(n)
    lps = max_layer * subgraph_size
    cb, cs = cols // lps, cols % subgraph_size
    lmean = ((rb[:, None] == cb[None, :]) & (rs[:, None] == cs[None, :]))
    lmean = lmean.astype(jnp.float32) / max_layer                            # (B*S, N)

    operands = (subx, params["Wt"], gather_dst, gather_src, scatter_dst,
                params["att_i"], params["att_j"], params["head_mat"],
                same_src, mask_e, params["bias"],
                params["gamma"].reshape(1, emb), params["beta"].reshape(1, emb),
                lmean)

    out = pl.pallas_call(
        fused_traverse_kernel,
        out_shape=jax.ShapeDtypeStruct((bs, emb), jnp.float32),
        grid=(1,),
        in_specs=[_full_spec(op.shape) for op in operands],
        out_specs=_full_spec((bs, emb)),
        compiler_params=pltpu.CompilerParams(
            dimension_semantics=("arbitrary",)),
    )(*operands)
    return out.reshape(batch_size, subgraph_size, emb)


# -------------------------------------------------------------- pure-JAX ref
def reference_forward(subx, edge_index, mask, params,
                      batch_size, max_layer, subgraph_size):
    n = subx.shape[0]
    src, dst = edge_index[0], edge_index[1]
    h = subx @ params["Wt"]
    x_i, x_j = h[dst], h[src]
    li = (x_i * params["att_i"]).reshape(-1, HEAD, K).sum(-1)
    lj = (x_j * params["att_j"]).reshape(-1, HEAD, K).sum(-1)
    logits = li + lj
    logits = jnp.where(logits > 0, logits, NEG_SLOPE_ATT * logits)
    seg_max = jax.ops.segment_max(logits, src, num_segments=n)
    ex = jnp.exp(logits - seg_max[src])
    denom = jax.ops.segment_sum(ex, src, num_segments=n)
    alpha = ex / (denom[src] + 1e-16)
    xjm = jnp.where(mask == 0, 0.0, x_j).reshape(-1, HEAD, K)
    msg = (xjm * alpha[:, :, None]).reshape(-1, EMB)
    aggr = jax.ops.segment_sum(msg, dst, num_segments=n)
    y = aggr + params["bias"]
    y = jnp.where(y > 0, y, NEG_SLOPE_ACT * y)
    mu = y.mean(0)
    var = (y * y).mean(0) - mu * mu
    yn = (y - mu) / jnp.sqrt(var + BN_EPS) * params["gamma"].reshape(-1) \
        + params["beta"].reshape(-1)
    return yn.reshape(batch_size, max_layer, subgraph_size, -1).mean(1)


# --------------------------------------------------------------------- main
if __name__ == "__main__":
    key = jax.random.PRNGKey(0)
    k1, k2, k3, k4, k5, k6 = jax.random.split(key, 6)

    # inputs
    subx = jax.random.normal(k1, (N, IN_DIM), dtype=jnp.float32)
    node_per_graph = MAX_LAYER * S
    src_local = jax.random.randint(k4, (B, EPG), 0, node_per_graph)
    dst_local = jax.random.randint(k5, (B, EPG), 0, node_per_graph)
    offsets = (jnp.arange(B) * node_per_graph)[:, None]
    edge_index = jnp.stack([(src_local + offsets).reshape(-1),
                            (dst_local + offsets).reshape(-1)], axis=0)
    mask = jax.random.randint(k6, (E, 1), 0, 2).astype(jnp.float32)

    # parameters (deterministic, matching __init__ shapes)
    bw = (6.0 / (IN_DIM + EMB)) ** 0.5
    W = jax.random.uniform(k2, (EMB, IN_DIM), jnp.float32, -bw, bw)       # xavier_uniform
    ba = (6.0 / (HEAD + 2 * K)) ** 0.5
    att = jax.random.uniform(k3, (1, HEAD, 2 * K), jnp.float32, -ba, ba)  # glorot
    head_idx = jnp.repeat(jnp.arange(HEAD), K)
    head_mat = (head_idx[:, None] == head_idx[None, :]).astype(jnp.float32)  # (EMB, EMB)

    params = {
        "Wt": W.T,                                            # (IN_DIM, EMB)
        "att_i": att[:, :, :K].reshape(1, EMB),
        "att_j": att[:, :, K:].reshape(1, EMB),
        "head_mat": head_mat,                                 # per-head sum, lane-replicated
        "bias": jnp.zeros((1, EMB), jnp.float32),             # zeros(bias)
        "gamma": jnp.ones((EMB,), jnp.float32),               # BatchNorm1d weight
        "beta": jnp.zeros((EMB,), jnp.float32),               # BatchNorm1d bias
    }

    fwd = jax.jit(traverse_subgnn_forward, static_argnums=(4, 5, 6))
    out = fwd(subx, edge_index, mask, params, B, MAX_LAYER, S)
    out = jax.block_until_ready(out)

    ref = reference_forward(subx, edge_index, mask, params, B, MAX_LAYER, S)
    assert out.shape == (B, S, EMB)
    assert jnp.allclose(out, ref, rtol=5e-3, atol=5e-3)

    print("KERNEL_OK")
</pallas_src>

<mosaic_0001>
module attributes {stable_mosaic.version = 11 : i64} {
  func.func @fused_traverse_kernel(%arg0: i32, %arg1: memref<96x32xf32, #tpu.memory_space<vmem>>, %arg2: memref<32x48xf32, #tpu.memory_space<vmem>>, %arg3: memref<48x96xf32, #tpu.memory_space<vmem>>, %arg4: memref<48x96xf32, #tpu.memory_space<vmem>>, %arg5: memref<96x48xf32, #tpu.memory_space<vmem>>, %arg6: memref<1x48xf32, #tpu.memory_space<vmem>>, %arg7: memref<1x48xf32, #tpu.memory_space<vmem>>, %arg8: memref<48x48xf32, #tpu.memory_space<vmem>>, %arg9: memref<48x48xf32, #tpu.memory_space<vmem>>, %arg10: memref<48x48xf32, #tpu.memory_space<vmem>>, %arg11: memref<1x48xf32, #tpu.memory_space<vmem>>, %arg12: memref<1x48xf32, #tpu.memory_space<vmem>>, %arg13: memref<1x48xf32, #tpu.memory_space<vmem>>, %arg14: memref<32x96xf32, #tpu.memory_space<vmem>>, %arg15: memref<32x48xf32, #tpu.memory_space<vmem>>) attributes {dimension_semantics = [#tpu.dimension_semantics<arbitrary>], iteration_bounds = array<i64: 1>, scalar_prefetch = 0 : i64, scratch_operands = 0 : i64, tpu.core_type = #tpu.core_type<tc>, window_params = [{pipeline_mode = #tpu.pipeline_mode<synchronous>, transform_indices = @transform_0, window_bounds = array<i64: 96, 32>}, {pipeline_mode = #tpu.pipeline_mode<synchronous>, transform_indices = @transform_1, window_bounds = array<i64: 32, 48>}, {pipeline_mode = #tpu.pipeline_mode<synchronous>, transform_indices = @transform_2, window_bounds = array<i64: 48, 96>}, {pipeline_mode = #tpu.pipeline_mode<synchronous>, transform_indices = @transform_3, window_bounds = array<i64: 48, 96>}, {pipeline_mode = #tpu.pipeline_mode<synchronous>, transform_indices = @transform_4, window_bounds = array<i64: 96, 48>}, {pipeline_mode = #tpu.pipeline_mode<synchronous>, transform_indices = @transform_5, window_bounds = array<i64: 1, 48>}, {pipeline_mode = #tpu.pipeline_mode<synchronous>, transform_indices = @transform_6, window_bounds = array<i64: 1, 48>}, {pipeline_mode = #tpu.pipeline_mode<synchronous>, transform_indices = @transform_7, window_bounds = array<i64: 48, 48>}, {pipeline_mode = #tpu.pipeline_mode<synchronous>, transform_indices = @transform_8, window_bounds = array<i64: 48, 48>}, {pipeline_mode = #tpu.pipeline_mode<synchronous>, transform_indices = @transform_9, window_bounds = array<i64: 48, 48>}, {pipeline_mode = #tpu.pipeline_mode<synchronous>, transform_indices = @transform_10, window_bounds = array<i64: 1, 48>}, {pipeline_mode = #tpu.pipeline_mode<synchronous>, transform_indices = @transform_11, window_bounds = array<i64: 1, 48>}, {pipeline_mode = #tpu.pipeline_mode<synchronous>, transform_indices = @transform_12, window_bounds = array<i64: 1, 48>}, {pipeline_mode = #tpu.pipeline_mode<synchronous>, transform_indices = @transform_13, window_bounds = array<i64: 32, 96>}, {pipeline_mode = #tpu.pipeline_mode<synchronous>, transform_indices = @transform_14, window_bounds = array<i64: 32, 48>}]} {
    %c0 = arith.constant 0 : index
    %c0_0 = arith.constant 0 : index
    %0 = vector.load %arg1[%c0, %c0_0] : memref<96x32xf32, #tpu.memory_space<vmem>>, vector<96x32xf32>
    %c0_1 = arith.constant 0 : index
    %c0_2 = arith.constant 0 : index
    %1 = vector.load %arg2[%c0_1, %c0_2] : memref<32x48xf32, #tpu.memory_space<vmem>>, vector<32x48xf32>
    %cst = arith.constant dense<0.000000e+00> : vector<96x48xf32>
    %2 = tpu.matmul %0, %1, %cst {dimension_numbers = #tpu.dot_dimension_numbers<[1], [0], [0], [1], [0, 0, 1, 1], [], []>} : vector<96x32xf32>, vector<32x48xf32>, vector<96x48xf32> -> vector<96x48xf32>
    %c0_3 = arith.constant 0 : index
    %c0_4 = arith.constant 0 : index
    %3 = vector.load %arg3[%c0_3, %c0_4] : memref<48x96xf32, #tpu.memory_space<vmem>>, vector<48x96xf32>
    %cst_5 = arith.constant dense<0.000000e+00> : vector<48x48xf32>
    %4 = tpu.matmul %3, %2, %cst_5 {dimension_numbers = #tpu.dot_dimension_numbers<[1], [0], [0], [1], [0, 0, 1, 1], [], []>} : vector<48x96xf32>, vector<96x48xf32>, vector<48x48xf32> -> vector<48x48xf32>
    %c0_6 = arith.constant 0 : index
    %c0_7 = arith.constant 0 : index
    %5 = vector.load %arg4[%c0_6, %c0_7] : memref<48x96xf32, #tpu.memory_space<vmem>>, vector<48x96xf32>
    %cst_8 = arith.constant dense<0.000000e+00> : vector<48x48xf32>
    %6 = tpu.matmul %5, %2, %cst_8 {dimension_numbers = #tpu.dot_dimension_numbers<[1], [0], [0], [1], [0, 0, 1, 1], [], []>} : vector<48x96xf32>, vector<96x48xf32>, vector<48x48xf32> -> vector<48x48xf32>
    %c0_9 = arith.constant 0 : index
    %c0_10 = arith.constant 0 : index
    %7 = vector.load %arg6[%c0_9, %c0_10] : memref<1x48xf32, #tpu.memory_space<vmem>>, vector<1x48xf32>
    %8 = vector.broadcast %7 : vector<1x48xf32> to vector<48x48xf32>
    %9 = arith.mulf %4, %8 : vector<48x48xf32>
    %c0_11 = arith.constant 0 : index
    %c0_12 = arith.constant 0 : index
    %10 = vector.load %arg7[%c0_11, %c0_12] : memref<1x48xf32, #tpu.memory_space<vmem>>, vector<1x48xf32>
    %11 = vector.broadcast %10 : vector<1x48xf32> to vector<48x48xf32>
    %12 = arith.mulf %6, %11 : vector<48x48xf32>
    %13 = arith.addf %9, %12 : vector<48x48xf32>
    %c0_13 = arith.constant 0 : index
    %c0_14 = arith.constant 0 : index
    %14 = vector.load %arg8[%c0_13, %c0_14] : memref<48x48xf32, #tpu.memory_space<vmem>>, vector<48x48xf32>
    %cst_15 = arith.constant dense<0.000000e+00> : vector<48x48xf32>
    %15 = tpu.matmul %13, %14, %cst_15 {dimension_numbers = #tpu.dot_dimension_numbers<[1], [0], [0], [1], [0, 0, 1, 1], [], []>} : vector<48x48xf32>, vector<48x48xf32>, vector<48x48xf32> -> vector<48x48xf32>
    %cst_16 = arith.constant 0.000000e+00 : f32
    %16 = vector.broadcast %cst_16 : f32 to vector<48x48xf32>
    %17 = arith.cmpf ogt, %15, %16 : vector<48x48xf32>
    %cst_17 = arith.constant 2.000000e-01 : f32
    %18 = vector.broadcast %cst_17 : f32 to vector<48x48xf32>
    %19 = arith.mulf %18, %15 : vector<48x48xf32>
    %20 = arith.select %17, %15, %19 : vector<48x48xi1>, vector<48x48xf32>
    %cst_18 = arith.constant dense<0xFF800000> : vector<48xf32>
    %21 = vector.multi_reduction <maximumf>, %20, %cst_18 [0] : vector<48x48xf32> to vector<48xf32>
    %22 = vector.shape_cast %21 : vector<48xf32> to vector<1x48xf32>
    %23 = vector.broadcast %22 : vector<1x48xf32> to vector<48x48xf32>
    %24 = arith.subf %20, %23 : vector<48x48xf32>
    %25 = math.exp %24 : vector<48x48xf32>
    %c0_19 = arith.constant 0 : index
    %c0_20 = arith.constant 0 : index
    %26 = vector.load %arg9[%c0_19, %c0_20] : memref<48x48xf32, #tpu.memory_space<vmem>>, vector<48x48xf32>
    %cst_21 = arith.constant dense<0.000000e+00> : vector<48x48xf32>
    %27 = tpu.matmul %26, %25, %cst_21 {dimension_numbers = #tpu.dot_dimension_numbers<[1], [0], [0], [1], [0, 0, 1, 1], [], []>} : vector<48x48xf32>, vector<48x48xf32>, vector<48x48xf32> -> vector<48x48xf32>
    %cst_22 = arith.constant 1.000000e-16 : f32
    %28 = vector.broadcast %cst_22 : f32 to vector<48x48xf32>
    %29 = arith.addf %27, %28 : vector<48x48xf32>
    %30 = arith.divf %25, %29 : vector<48x48xf32>
    %c0_23 = arith.constant 0 : index
    %c0_24 = arith.constant 0 : index
    %31 = vector.load %arg10[%c0_23, %c0_24] : memref<48x48xf32, #tpu.memory_space<vmem>>, vector<48x48xf32>
    %32 = arith.mulf %6, %31 : vector<48x48xf32>
    %33 = arith.mulf %32, %30 : vector<48x48xf32>
    %c0_25 = arith.constant 0 : index
    %c0_26 = arith.constant 0 : index
    %34 = vector.load %arg5[%c0_25, %c0_26] : memref<96x48xf32, #tpu.memory_space<vmem>>, vector<96x48xf32>
    %cst_27 = arith.constant dense<0.000000e+00> : vector<96x48xf32>
    %35 = tpu.matmul %34, %33, %cst_27 {dimension_numbers = #tpu.dot_dimension_numbers<[1], [0], [0], [1], [0, 0, 1, 1], [], []>} : vector<96x48xf32>, vector<48x48xf32>, vector<96x48xf32> -> vector<96x48xf32>
    %c0_28 = arith.constant 0 : index
    %c0_29 = arith.constant 0 : index
    %36 = vector.load %arg11[%c0_28, %c0_29] : memref<1x48xf32, #tpu.memory_space<vmem>>, vector<1x48xf32>
    %37 = vector.broadcast %36 : vector<1x48xf32> to vector<96x48xf32>
    %38 = arith.addf %35, %37 : vector<96x48xf32>
    %cst_30 = arith.constant 0.000000e+00 : f32
    %39 = vector.broadcast %cst_30 : f32 to vector<96x48xf32>
    %40 = arith.cmpf ogt, %38, %39 : vector<96x48xf32>
    %cst_31 = arith.constant 1.000000e-01 : f32
    %41 = vector.broadcast %cst_31 : f32 to vector<96x48xf32>
    %42 = arith.mulf %41, %38 : vector<96x48xf32>
    %43 = arith.select %40, %38, %42 : vector<96x48xi1>, vector<96x48xf32>
    %cst_32 = arith.constant dense<0.000000e+00> : vector<48xf32>
    %44 = vector.multi_reduction <add>, %43, %cst_32 [0] : vector<96x48xf32> to vector<48xf32>
    %45 = vector.shape_cast %44 : vector<48xf32> to vector<1x48xf32>
    %cst_33 = arith.constant 9.600000e+01 : f32
    %46 = vector.broadcast %cst_33 : f32 to vector<1x48xf32>
    %47 = arith.divf %45, %46 : vector<1x48xf32>
    %48 = vector.broadcast %47 : vector<1x48xf32> to vector<96x48xf32>
    %49 = arith.subf %43, %48 : vector<96x48xf32>
    %50 = arith.mulf %49, %49 : vector<96x48xf32>
    %cst_34 = arith.constant dense<0.000000e+00> : vector<48xf32>
    %51 = vector.multi_reduction <add>, %50, %cst_34 [0] : vector<96x48xf32> to vector<48xf32>
    %52 = vector.shape_cast %51 : vector<48xf32> to vector<1x48xf32>
    %cst_35 = arith.constant 9.600000e+01 : f32
    %53 = vector.broadcast %cst_35 : f32 to vector<1x48xf32>
    %54 = arith.divf %52, %53 : vector<1x48xf32>
    %cst_36 = arith.constant 9.99999974E-6 : f32
    %55 = vector.broadcast %cst_36 : f32 to vector<1x48xf32>
    %56 = arith.addf %54, %55 : vector<1x48xf32>
    %57 = math.rsqrt %56 : vector<1x48xf32>
    %58 = vector.broadcast %57 : vector<1x48xf32> to vector<96x48xf32>
    %59 = arith.mulf %49, %58 : vector<96x48xf32>
    %c0_37 = arith.constant 0 : index
    %c0_38 = arith.constant 0 : index
    %60 = vector.load %arg12[%c0_37, %c0_38] : memref<1x48xf32, #tpu.memory_space<vmem>>, vector<1x48xf32>
    %61 = vector.broadcast %60 : vector<1x48xf32> to vector<96x48xf32>
    %62 = arith.mulf %59, %61 : vector<96x48xf32>
    %c0_39 = arith.constant 0 : index
    %c0_40 = arith.constant 0 : index
    %63 = vector.load %arg13[%c0_39, %c0_40] : memref<1x48xf32, #tpu.memory_space<vmem>>, vector<1x48xf32>
    %64 = vector.broadcast %63 : vector<1x48xf32> to vector<96x48xf32>
    %65 = arith.addf %62, %64 : vector<96x48xf32>
    %c0_41 = arith.constant 0 : index
    %c0_42 = arith.constant 0 : index
    %66 = vector.load %arg14[%c0_41, %c0_42] : memref<32x96xf32, #tpu.memory_space<vmem>>, vector<32x96xf32>
    %cst_43 = arith.constant dense<0.000000e+00> : vector<32x48xf32>
    %67 = tpu.matmul %66, %65, %cst_43 {dimension_numbers = #tpu.dot_dimension_numbers<[1], [0], [0], [1], [0, 0, 1, 1], [], []>} : vector<32x96xf32>, vector<96x48xf32>, vector<32x48xf32> -> vector<32x48xf32>
    %c0_44 = arith.constant 0 : index
    %c0_45 = arith.constant 0 : index
    %68 = vector.load %arg15[%c0_44, %c0_45] : memref<32x48xf32, #tpu.memory_space<vmem>>, vector<32x48xf32>
    tpu.vector_store %arg15[%c0_44, %c0_45], %67 {strides = array<i32>} : memref<32x48xf32, #tpu.memory_space<vmem>>, vector<32x48xf32>,
    return
  }
  func.func @transform_0(%arg0: i32) -> (i32, i32) {
    %c0_i32 = arith.constant 0 : i32
    %c0_i32_0 = arith.constant 0 : i32
    %c0_i32_1 = arith.constant 0 : i32
    return %c0_i32, %c0_i32_0 : i32, i32
  }
  func.func @transform_1(%arg0: i32) -> (i32, i32) {
    %c0_i32 = arith.constant 0 : i32
    %c0_i32_0 = arith.constant 0 : i32
    %c0_i32_1 = arith.constant 0 : i32
    return %c0_i32, %c0_i32_0 : i32, i32
  }
  func.func @transform_2(%arg0: i32) -> (i32, i32) {
    %c0_i32 = arith.constant 0 : i32
    %c0_i32_0 = arith.constant 0 : i32
    %c0_i32_1 = arith.constant 0 : i32
    return %c0_i32, %c0_i32_0 : i32, i32
  }
  func.func @transform_3(%arg0: i32) -> (i32, i32) {
    %c0_i32 = arith.constant 0 : i32
    %c0_i32_0 = arith.constant 0 : i32
    %c0_i32_1 = arith.constant 0 : i32
    return %c0_i32, %c0_i32_0 : i32, i32
  }
  func.func @transform_4(%arg0: i32) -> (i32, i32) {
    %c0_i32 = arith.constant 0 : i32
    %c0_i32_0 = arith.constant 0 : i32
    %c0_i32_1 = arith.constant 0 : i32
    return %c0_i32, %c0_i32_0 : i32, i32
  }
  func.func @transform_5(%arg0: i32) -> (i32, i32) {
    %c0_i32 = arith.constant 0 : i32
    %c0_i32_0 = arith.constant 0 : i32
    %c0_i32_1 = arith.constant 0 : i32
    return %c0_i32, %c0_i32_0 : i32, i32
  }
  func.func @transform_6(%arg0: i32) -> (i32, i32) {
    %c0_i32 = arith.constant 0 : i32
    %c0_i32_0 = arith.constant 0 : i32
    %c0_i32_1 = arith.constant 0 : i32
    return %c0_i32, %c0_i32_0 : i32, i32
  }
  func.func @transform_7(%arg0: i32) -> (i32, i32) {
    %c0_i32 = arith.constant 0 : i32
    %c0_i32_0 = arith.constant 0 : i32
    %c0_i32_1 = arith.constant 0 : i32
    return %c0_i32, %c0_i32_0 : i32, i32
  }
  func.func @transform_8(%arg0: i32) -> (i32, i32) {
    %c0_i32 = arith.constant 0 : i32
    %c0_i32_0 = arith.constant 0 : i32
    %c0_i32_1 = arith.constant 0 : i32
    return %c0_i32, %c0_i32_0 : i32, i32
  }
  func.func @transform_9(%arg0: i32) -> (i32, i32) {
    %c0_i32 = arith.constant 0 : i32
    %c0_i32_0 = arith.constant 0 : i32
    %c0_i32_1 = arith.constant 0 : i32
    return %c0_i32, %c0_i32_0 : i32, i32
  }
  func.func @transform_10(%arg0: i32) -> (i32, i32) {
    %c0_i32 = arith.constant 0 : i32
    %c0_i32_0 = arith.constant 0 : i32
    %c0_i32_1 = arith.constant 0 : i32
    return %c0_i32, %c0_i32_0 : i32, i32
  }
  func.func @transform_11(%arg0: i32) -> (i32, i32) {
    %c0_i32 = arith.constant 0 : i32
    %c0_i32_0 = arith.constant 0 : i32
    %c0_i32_1 = arith.constant 0 : i32
    return %c0_i32, %c0_i32_0 : i32, i32
  }
  func.func @transform_12(%arg0: i32) -> (i32, i32) {
    %c0_i32 = arith.constant 0 : i32
    %c0_i32_0 = arith.constant 0 : i32
    %c0_i32_1 = arith.constant 0 : i32
    return %c0_i32, %c0_i32_0 : i32, i32
  }
  func.func @transform_13(%arg0: i32) -> (i32, i32) {
    %c0_i32 = arith.constant 0 : i32
    %c0_i32_0 = arith.constant 0 : i32
    %c0_i32_1 = arith.constant 0 : i32
    return %c0_i32, %c0_i32_0 : i32, i32
  }
  func.func @transform_14(%arg0: i32) -> (i32, i32) {
    %c0_i32 = arith.constant 0 : i32
    %c0_i32_0 = arith.constant 0 : i32
    %c0_i32_1 = arith.constant 0 : i32
    return %c0_i32, %c0_i32_0 : i32, i32
  }
}

</mosaic_0001>

<llo_original>
// kernel: traverse_subgnn_forward.1
$region0: #{traverse_subgnn_forward.1}
  #allocation0 [shape = 'u32[]', space=smem, size = 0x4, offset = 0x4, fixed_abs, tag = 'smem constant byte address 0x4 - core index']
  #allocation1 [shape = 'u32[144,128]{1,0:T(1,128)}', space=vmem, size = 0x12000, scoped, tag = 'internal scratch']
  %s0 = inlined_call_operand.vmem [shape: f32[96,32], index: 0, kind: input, shape index: {}]
  %s1 = inlined_call_operand.vmem [shape: f32[32,48], index: 1, kind: input, shape index: {}]
  %s2 = inlined_call_operand.vmem [shape: f32[48,96], index: 2, kind: input, shape index: {}]
  %s3 = inlined_call_operand.vmem [shape: f32[48,96], index: 3, kind: input, shape index: {}]
  %s4 = inlined_call_operand.vmem [shape: f32[96,48], index: 4, kind: input, shape index: {}]
  %s5 = inlined_call_operand.vmem [shape: f32[1,48], index: 5, kind: input, shape index: {}]
  %s6 = inlined_call_operand.vmem [shape: f32[1,48], index: 6, kind: input, shape index: {}]
  %s7 = inlined_call_operand.vmem [shape: f32[48,48], index: 7, kind: input, shape index: {}]
  %s8 = inlined_call_operand.vmem [shape: f32[48,48], index: 8, kind: input, shape index: {}]
  %s9 = inlined_call_operand.vmem [shape: f32[48,48], index: 9, kind: input, shape index: {}]
  %s10 = inlined_call_operand.vmem [shape: f32[1,48], index: 10, kind: input, shape index: {}]
  %s11 = inlined_call_operand.vmem [shape: f32[1,48], index: 11, kind: input, shape index: {}]
  %s12 = inlined_call_operand.vmem [shape: f32[1,48], index: 12, kind: input, shape index: {}]
  %s13 = inlined_call_operand.vmem [shape: f32[32,96], index: 13, kind: input, shape index: {}]
  %s14 = inlined_call_operand.hbm [shape: f32[32,48], index: 14, kind: output, shape index: {}]
  %s15 = sld [smem:[#allocation0]]
  $region66: #{traverse_subgnn_forward.1} parent=0
    _
  %s17 = ssub.s32 1, %s15
  %s18 = scalar_select 0, %s17, %s15
  $region1: #{traverse_subgnn_forward.1} parent=0
    #allocation2 [shape = 'u8[16384]{0}', space=vmem, size = 0x4000, scoped, tag = 'output window, operand 0, single buffered']
    #allocation3 [shape = 's32[1]{0}', space=sflag, size = 0x4, scoped, tag = 'scoped memory for traverse_subgnn_forward.1']
    %19 = vsyncpa [#allocation3], 0
    // Predicated region
    $region2: #{traverse_subgnn_forward.1} parent=1 // pred_check
      _
    $region3: #{traverse_subgnn_forward.1} parent=1 // pred_check_branch
      %21 = sbr.rel (0) target = $region5
    $region4: #{traverse_subgnn_forward.1} parent=1 // pred_region
      _
    $region5: #{traverse_subgnn_forward.1} parent=1 // pred_fallthru
      _
    // Predicated region
    $region6: #{traverse_subgnn_forward.1} parent=1 // pred_check
      _
    $region7: #{traverse_subgnn_forward.1} parent=1 // pred_check_branch
      %23 = sbr.rel (0) target = $region9
    $region8: #{traverse_subgnn_forward.1} parent=1 // pred_region
      _
    $region9: #{traverse_subgnn_forward.1} parent=1 // pred_fallthru
      _
    // Predicated region
    $region10: #{traverse_subgnn_forward.1} parent=1 // pred_check
      _
    $region11: #{traverse_subgnn_forward.1} parent=1 // pred_check_branch
      %25 = sbr.rel (0) target = $region13
    $region12: #{traverse_subgnn_forward.1} parent=1 // pred_region
      _
    $region13: #{traverse_subgnn_forward.1} parent=1 // pred_fallthru
      _
    // Predicated region
    $region14: #{traverse_subgnn_forward.1} parent=1 // pred_check
      _
    $region15: #{traverse_subgnn_forward.1} parent=1 // pred_check_branch
      %27 = sbr.rel (0) target = $region17
    $region16: #{traverse_subgnn_forward.1} parent=1 // pred_region
      _
    $region17: #{traverse_subgnn_forward.1} parent=1 // pred_fallthru
      _
    // Predicated region
    $region18: #{traverse_subgnn_forward.1} parent=1 // pred_check
      _
    $region19: #{traverse_subgnn_forward.1} parent=1 // pred_check_branch
      %29 = sbr.rel (0) target = $region21
    $region20: #{traverse_subgnn_forward.1} parent=1 // pred_region
      _
    $region21: #{traverse_subgnn_forward.1} parent=1 // pred_fallthru
      _
    // Predicated region
    $region22: #{traverse_subgnn_forward.1} parent=1 // pred_check
      _
    $region23: #{traverse_subgnn_forward.1} parent=1 // pred_check_branch
      %31 = sbr.rel (0) target = $region25
    $region24: #{traverse_subgnn_forward.1} parent=1 // pred_region
      _
    $region25: #{traverse_subgnn_forward.1} parent=1 // pred_fallthru
      _
    // Predicated region
    $region26: #{traverse_subgnn_forward.1} parent=1 // pred_check
      _
    $region27: #{traverse_subgnn_forward.1} parent=1 // pred_check_branch
      %33 = sbr.rel (0) target = $region29
    $region28: #{traverse_subgnn_forward.1} parent=1 // pred_region
      _
    $region29: #{traverse_subgnn_forward.1} parent=1 // pred_fallthru
      _
    // Predicated region
    $region30: #{traverse_subgnn_forward.1} parent=1 // pred_check
      _
    $region31: #{traverse_subgnn_forward.1} parent=1 // pred_check_branch
      %35 = sbr.rel (0) target = $region33
    $region32: #{traverse_subgnn_forward.1} parent=1 // pred_region
      _
    $region33: #{traverse_subgnn_forward.1} parent=1 // pred_fallthru
      _
    // Predicated region
    $region34: #{traverse_subgnn_forward.1} parent=1 // pred_check
      _
    $region35: #{traverse_subgnn_forward.1} parent=1 // pred_check_branch
      %37 = sbr.rel (0) target = $region37
    $region36: #{traverse_subgnn_forward.1} parent=1 // pred_region
      _
    $region37: #{traverse_subgnn_forward.1} parent=1 // pred_fallthru
      _
    // Predicated region
    $region38: #{traverse_subgnn_forward.1} parent=1 // pred_check
      _
    $region39: #{traverse_subgnn_forward.1} parent=1 // pred_check_branch
      %39 = sbr.rel (0) target = $region41
    $region40: #{traverse_subgnn_forward.1} parent=1 // pred_region
      _
    $region41: #{traverse_subgnn_forward.1} parent=1 // pred_fallthru
      _
    // Predicated region
    $region42: #{traverse_subgnn_forward.1} parent=1 // pred_check
      _
    $region43: #{traverse_subgnn_forward.1} parent=1 // pred_check_branch
      %41 = sbr.rel (0) target = $region45
    $region44: #{traverse_subgnn_forward.1} parent=1 // pred_region
      _
    $region45: #{traverse_subgnn_forward.1} parent=1 // pred_fallthru
      _
    // Predicated region
    $region46: #{traverse_subgnn_forward.1} parent=1 // pred_check
      _
    $region47: #{traverse_subgnn_forward.1} parent=1 // pred_check_branch
      %43 = sbr.rel (0) target = $region49
    $region48: #{traverse_subgnn_forward.1} parent=1 // pred_region
      _
    $region49: #{traverse_subgnn_forward.1} parent=1 // pred_fallthru
      _
    // Predicated region
    $region50: #{traverse_subgnn_forward.1} parent=1 // pred_check
      _
    $region51: #{traverse_subgnn_forward.1} parent=1 // pred_check_branch
      %45 = sbr.rel (0) target = $region53
    $region52: #{traverse_subgnn_forward.1} parent=1 // pred_region
      _
    $region53: #{traverse_subgnn_forward.1} parent=1 // pred_fallthru
      _
    // Predicated region
    $region54: #{traverse_subgnn_forward.1} parent=1 // pred_check
      _
    $region55: #{traverse_subgnn_forward.1} parent=1 // pred_check_branch
      %47 = sbr.rel (0) target = $region57
    $region56: #{traverse_subgnn_forward.1} parent=1 // pred_region
      _
    $region57: #{traverse_subgnn_forward.1} parent=1 // pred_fallthru
      _
    %v48 = vld [vmem:[%s0] sm:$0xff]
    %v49 = vld [vmem:[%s0 + $0x8] sm:$0xff]
    %v50 = vld [vmem:[%s0 + $0x10] sm:$0xff]
    %v51 = vld [vmem:[%s0 + $0x18] sm:$0xff]
    %v52 = vld [vmem:[%s0 + $0x20] sm:$0xff]
    %v53 = vld [vmem:[%s0 + $0x28] sm:$0xff]
    %v54 = vld [vmem:[%s0 + $0x30] sm:$0xff]
    %v55 = vld [vmem:[%s0 + $0x38] sm:$0xff]
    %v56 = vld [vmem:[%s0 + $0x40] sm:$0xff]
    %v57 = vld [vmem:[%s0 + $0x48] sm:$0xff]
    %v58 = vld [vmem:[%s0 + $0x50] sm:$0xff]
    %v59 = vld [vmem:[%s0 + $0x58] sm:$0xff]
    %v60 = vld [vmem:[%s1] sm:$0xff]
    %v61 = vld [vmem:[%s1 + $0x8] sm:$0xff]
    %v62 = vld [vmem:[%s1 + $0x10] sm:$0xff]
    %v63 = vld [vmem:[%s1 + $0x18] sm:$0xff]
    %vm64 = vcmask 261120
    %v66 = vsel %vm64, %v48, 0
    %v69 = vsel %vm64, %v49, 0
    %v72 = vsel %vm64, %v50, 0
    %v75 = vsel %vm64, %v51, 0
    %v78 = vsel %vm64, %v52, 0
    %v81 = vsel %vm64, %v53, 0
    %v84 = vsel %vm64, %v54, 0
    %v87 = vsel %vm64, %v55, 0
    %v90 = vsel %vm64, %v56, 0
    %v93 = vsel %vm64, %v57, 0
    %v96 = vsel %vm64, %v58, 0
    %v99 = vsel %vm64, %v59, 0
    %101 = vmatprep.subr.mxu0 0.0
    %102 = vmatpush1.msra.mxu0 0.0
    %103 = vmatprep.subr.mxu0 0.0
    %104 = vmatpush1.msra.mxu0 0.0
    %105 = vmatprep.subr.mxu0 0.0
    %106 = vmatpush1.msra.mxu0 0.0
    %107 = vmatprep.subr.mxu0 0.0
    %108 = vmatpush1.msra.mxu0 0.0
    %109 = vmatprep.subr.mxu0 0.0
    %110 = vmatpush1.msra.mxu0 0.0
    %111 = vmatprep.subr.mxu0 0.0
    %112 = vmatpush1.msra.mxu0 0.0
    %113 = vmatprep.subr.mxu0 0.0
    %114 = vmatpush1.msra.mxu0 0.0
    %115 = vmatprep.subr.mxu0 0.0
    %116 = vmatpush1.msra.mxu0 0.0
    %117 = vmatprep.subr.mxu0 0.0
    %118 = vmatpush1.msra.mxu0 0.0
    %119 = vmatprep.subr.mxu0 0.0
    %120 = vmatpush1.msra.mxu0 0.0
    %121 = vmatprep.subr.mxu0 0.0
    %122 = vmatpush1.msra.mxu0 0.0
    %123 = vmatprep.subr.mxu0 0.0
    %124 = vmatpush1.msra.mxu0 0.0
    %125 = vmatprep.subr.mxu0 0.0
    %126 = vmatpush1.msra.mxu0 %v63
    %127 = vmatprep.subr.mxu0 0.0
    %128 = vmatpush1.msra.mxu0 %v62
    %129 = vmatprep.subr.mxu0 0.0
    %130 = vmatpush1.msra.mxu0 %v61
    %131 = vmatprep.subr.mxu0 0.0
    %132 = vmatpush1.msra.mxu0 %v60
    %133 = vmatprep.subr.mxu0 0.0
    %134 = vmatpush2.msra.mxu0 0.0
    %135 = vmatprep.subr.mxu0 0.0
    %136 = vmatpush2.msra.mxu0 0.0
    %137 = vmatprep.subr.mxu0 0.0
    %138 = vmatpush2.msra.mxu0 0.0
    %139 = vmatprep.subr.mxu0 0.0
    %140 = vmatpush2.msra.mxu0 0.0
    %141 = vmatprep.subr.mxu0 0.0
    %142 = vmatpush2.msra.mxu0 0.0
    %143 = vmatprep.subr.mxu0 0.0
    %144 = vmatpush2.msra.mxu0 0.0
    %145 = vmatprep.subr.mxu0 0.0
    %146 = vmatpush2.msra.mxu0 0.0
    %147 = vmatprep.subr.mxu0 0.0
    %148 = vmatpush2.msra.mxu0 0.0
    %149 = vmatprep.subr.mxu0 0.0
    %150 = vmatpush2.msra.mxu0 0.0
    %151 = vmatprep.subr.mxu0 0.0
    %152 = vmatpush2.msra.mxu0 0.0
    %153 = vmatprep.subr.mxu0 0.0
    %154 = vmatpush2.msra.mxu0 0.0
    %155 = vmatprep.subr.mxu0 0.0
    %156 = vmatpush2.msra.mxu0 0.0
    %157 = vmatprep.subr.mxu0 0.0
    %158 = vmatpush2.msra.mxu0 0.0
    %159 = vmatprep.subr.mxu0 0.0
    %160 = vmatpush2.msra.mxu0 0.0
    %161 = vmatprep.subr.mxu0 0.0
    %162 = vmatpush2.msra.mxu0 0.0
    %163 = vmatprep.subr.mxu0 0.0
    %164 = vmatpush2.msra.mxu0 0.0
    %165 = vmatprep.mubr.f32.mxu0 0.0
    %166 = vmatmul.mubr.f32.gmra.mxu0 %v66
    %v167 = vpop.f32.mrf.mxu0
    %v168 = vadd.f32 0.0, %v167
    %v169 = vpop.f32.mrf.mxu0
    %170 = vmatprep.mubr.f32.mxu0 0.0
    %171 = vmatmul.mubr.f32.gmra.mxu0 %v69
    %v172 = vpop.f32.mrf.mxu0
    %v173 = vadd.f32 0.0, %v172
    %v174 = vpop.f32.mrf.mxu0
    %175 = vmatprep.mubr.f32.mxu0 0.0
    %176 = vmatmul.mubr.f32.gmra.mxu0 %v72
    %v177 = vpop.f32.mrf.mxu0
    %v178 = vadd.f32 0.0, %v177
    %v179 = vpop.f32.mrf.mxu0
    %180 = vmatprep.mubr.f32.mxu0 0.0
    %181 = vmatmul.mubr.f32.gmra.mxu0 %v75
    %v182 = vpop.f32.mrf.mxu0
    %v183 = vadd.f32 0.0, %v182
    %v184 = vpop.f32.mrf.mxu0
    %185 = vmatprep.mubr.f32.mxu0 0.0
    %186 = vmatmul.mubr.f32.gmra.mxu0 %v78
    %v187 = vpop.f32.mrf.mxu0
    %v188 = vadd.f32 0.0, %v187
    %v189 = vpop.f32.mrf.mxu0
    %190 = vmatprep.mubr.f32.mxu0 0.0
    %191 = vmatmul.mubr.f32.gmra.mxu0 %v81
    %v192 = vpop.f32.mrf.mxu0
    %v193 = vadd.f32 0.0, %v192
    %v194 = vpop.f32.mrf.mxu0
    %195 = vmatprep.mubr.f32.mxu0 0.0
    %196 = vmatmul.mubr.f32.gmra.mxu0 %v84
    %v197 = vpop.f32.mrf.mxu0
    %v198 = vadd.f32 0.0, %v197
    %v199 = vpop.f32.mrf.mxu0
    %200 = vmatprep.mubr.f32.mxu0 0.0
    %201 = vmatmul.mubr.f32.gmra.mxu0 %v87
    %v202 = vpop.f32.mrf.mxu0
    %v203 = vadd.f32 0.0, %v202
    %v204 = vpop.f32.mrf.mxu0
    %205 = vmatprep.mubr.f32.mxu0 0.0
    %206 = vmatmul.mubr.f32.gmra.mxu0 %v90
    %v207 = vpop.f32.mrf.mxu0
    %v208 = vadd.f32 0.0, %v207
    %v209 = vpop.f32.mrf.mxu0
    %210 = vmatprep.mubr.f32.mxu0 0.0
    %211 = vmatmul.mubr.f32.gmra.mxu0 %v93
    %v212 = vpop.f32.mrf.mxu0
    %v213 = vadd.f32 0.0, %v212
    %v214 = vpop.f32.mrf.mxu0
    %215 = vmatprep.mubr.f32.mxu0 0.0
    %216 = vmatmul.mubr.f32.gmra.mxu0 %v96
    %v217 = vpop.f32.mrf.mxu0
    %v218 = vadd.f32 0.0, %v217
    %v219 = vpop.f32.mrf.mxu0
    %220 = vmatprep.mubr.f32.mxu0 0.0
    %221 = vmatmul.mubr.f32.gmra.mxu0 %v99
    %v222 = vpop.f32.mrf.mxu0
    %v223 = vadd.f32 0.0, %v222
    %v224 = vpop.f32.mrf.mxu0
    %225 = vdwg.mxu0
    %v226 = vld [vmem:[%s2] sm:$0xff]
    %v227 = vld [vmem:[%s2 + $0x8] sm:$0xff]
    %v228 = vld [vmem:[%s2 + $0x10] sm:$0xff]
    %v229 = vld [vmem:[%s2 + $0x18] sm:$0xff]
    %v230 = vld [vmem:[%s2 + $0x20] sm:$0xff]
    %v231 = vld [vmem:[%s2 + $0x28] sm:$0xff]
    %vm232 = vcmask 785408
    %v234 = vsel %vm232, %v226, 0
    %v237 = vsel %vm232, %v227, 0
    %v240 = vsel %vm232, %v228, 0
    %v243 = vsel %vm232, %v229, 0
    %v246 = vsel %vm232, %v230, 0
    %v249 = vsel %vm232, %v231, 0
    %251 = vmatprep.subr.mxu0 0.0
    %252 = vmatpush1.msra.mxu0 0.0
    %253 = vmatprep.subr.mxu0 0.0
    %254 = vmatpush1.msra.mxu0 0.0
    %255 = vmatprep.subr.mxu0 0.0
    %256 = vmatpush1.msra.mxu0 0.0
    %257 = vmatprep.subr.mxu0 0.0
    %258 = vmatpush1.msra.mxu0 0.0
    %259 = vmatprep.subr.mxu0 0.0
    %260 = vmatpush1.msra.mxu0 %v223
    %261 = vmatprep.subr.mxu0 0.0
    %262 = vmatpush1.msra.mxu0 %v218
    %263 = vmatprep.subr.mxu0 0.0
    %264 = vmatpush1.msra.mxu0 %v213
    %265 = vmatprep.subr.mxu0 0.0
    %266 = vmatpush1.msra.mxu0 %v208
    %267 = vmatprep.subr.mxu0 0.0
    %268 = vmatpush1.msra.mxu0 %v203
    %269 = vmatprep.subr.mxu0 0.0
    %270 = vmatpush1.msra.mxu0 %v198
    %271 = vmatprep.subr.mxu0 0.0
    %272 = vmatpush1.msra.mxu0 %v193
    %273 = vmatprep.subr.mxu0 0.0
    %274 = vmatpush1.msra.mxu0 %v188
    %275 = vmatprep.subr.mxu0 0.0
    %276 = vmatpush1.msra.mxu0 %v183
    %277 = vmatprep.subr.mxu0 0.0
    %278 = vmatpush1.msra.mxu0 %v178
    %279 = vmatprep.subr.mxu0 0.0
    %280 = vmatpush1.msra.mxu0 %v173
    %281 = vmatprep.subr.mxu0 0.0
    %282 = vmatpush1.msra.mxu0 %v168
    %283 = vmatprep.subr.mxu0 0.0
    %284 = vmatpush2.msra.mxu0 0.0
    %285 = vmatprep.subr.mxu0 0.0
    %286 = vmatpush2.msra.mxu0 0.0
    %287 = vmatprep.subr.mxu0 0.0
    %288 = vmatpush2.msra.mxu0 0.0
    %289 = vmatprep.subr.mxu0 0.0
    %290 = vmatpush2.msra.mxu0 0.0
    %291 = vmatprep.subr.mxu0 0.0
    %292 = vmatpush2.msra.mxu0 0.0
    %293 = vmatprep.subr.mxu0 0.0
    %294 = vmatpush2.msra.mxu0 0.0
    %295 = vmatprep.subr.mxu0 0.0
    %296 = vmatpush2.msra.mxu0 0.0
    %297 = vmatprep.subr.mxu0 0.0
    %298 = vmatpush2.msra.mxu0 0.0
    %299 = vmatprep.subr.mxu0 0.0
    %300 = vmatpush2.msra.mxu0 0.0
    %301 = vmatprep.subr.mxu0 0.0
    %302 = vmatpush2.msra.mxu0 0.0
    %303 = vmatprep.subr.mxu0 0.0
    %304 = vmatpush2.msra.mxu0 0.0
    %305 = vmatprep.subr.mxu0 0.0
    %306 = vmatpush2.msra.mxu0 0.0
    %307 = vmatprep.subr.mxu0 0.0
    %308 = vmatpush2.msra.mxu0 0.0
    %309 = vmatprep.subr.mxu0 0.0
    %310 = vmatpush2.msra.mxu0 0.0
    %311 = vmatprep.subr.mxu0 0.0
    %312 = vmatpush2.msra.mxu0 0.0
    %313 = vmatprep.subr.mxu0 0.0
    %314 = vmatpush2.msra.mxu0 0.0
    %315 = vmatprep.mubr.f32.mxu0 0.0
    %316 = vmatmul.mubr.f32.gmra.mxu0 %v234
    %v317 = vpop.f32.mrf.mxu0
    %v318 = vadd.f32 0.0, %v317
    %v319 = vpop.f32.mrf.mxu0
    %320 = vmatprep.mubr.f32.mxu0 0.0
    %321 = vmatmul.mubr.f32.gmra.mxu0 %v237
    %v322 = vpop.f32.mrf.mxu0
    %v323 = vadd.f32 0.0, %v322
    %v324 = vpop.f32.mrf.mxu0
    %325 = vmatprep.mubr.f32.mxu0 0.0
    %326 = vmatmul.mubr.f32.gmra.mxu0 %v240
    %v327 = vpop.f32.mrf.mxu0
    %v328 = vadd.f32 0.0, %v327
    %v329 = vpop.f32.mrf.mxu0
    %330 = vmatprep.mubr.f32.mxu0 0.0
    %331 = vmatmul.mubr.f32.gmra.mxu0 %v243
    %v332 = vpop.f32.mrf.mxu0
    %v333 = vadd.f32 0.0, %v332
    %v334 = vpop.f32.mrf.mxu0
    %335 = vmatprep.mubr.f32.mxu0 0.0
    %336 = vmatmul.mubr.f32.gmra.mxu0 %v246
    %v337 = vpop.f32.mrf.mxu0
    %v338 = vadd.f32 0.0, %v337
    %v339 = vpop.f32.mrf.mxu0
    %340 = vmatprep.mubr.f32.mxu0 0.0
    %341 = vmatmul.mubr.f32.gmra.mxu0 %v249
    %v342 = vpop.f32.mrf.mxu0
    %v343 = vadd.f32 0.0, %v342
    %v344 = vpop.f32.mrf.mxu0
    %345 = vdwg.mxu0
    %v346 = vld [vmem:[%s3] sm:$0xff]
    %v347 = vld [vmem:[%s3 + $0x8] sm:$0xff]
    %v348 = vld [vmem:[%s3 + $0x10] sm:$0xff]
    %v349 = vld [vmem:[%s3 + $0x18] sm:$0xff]
    %v350 = vld [vmem:[%s3 + $0x20] sm:$0xff]
    %v351 = vld [vmem:[%s3 + $0x28] sm:$0xff]
    %v353 = vsel %vm232, %v346, 0
    %v356 = vsel %vm232, %v347, 0
    %v359 = vsel %vm232, %v348, 0
    %v362 = vsel %vm232, %v349, 0
    %v365 = vsel %vm232, %v350, 0
    %v368 = vsel %vm232, %v351, 0
    %370 = vmatprep.subr.mxu0 0.0
    %371 = vmatpush1.msra.mxu0 0.0
    %372 = vmatprep.subr.mxu0 0.0
    %373 = vmatpush1.msra.mxu0 0.0
    %374 = vmatprep.subr.mxu0 0.0
    %375 = vmatpush1.msra.mxu0 0.0
    %376 = vmatprep.subr.mxu0 0.0
    %377 = vmatpush1.msra.mxu0 0.0
    %378 = vmatprep.subr.mxu0 0.0
    %379 = vmatpush1.msra.mxu0 %v223
    %380 = vmatprep.subr.mxu0 0.0
    %381 = vmatpush1.msra.mxu0 %v218
    %382 = vmatprep.subr.mxu0 0.0
    %383 = vmatpush1.msra.mxu0 %v213
    %384 = vmatprep.subr.mxu0 0.0
    %385 = vmatpush1.msra.mxu0 %v208
    %386 = vmatprep.subr.mxu0 0.0
    %387 = vmatpush1.msra.mxu0 %v203
    %388 = vmatprep.subr.mxu0 0.0
    %389 = vmatpush1.msra.mxu0 %v198
    %390 = vmatprep.subr.mxu0 0.0
    %391 = vmatpush1.msra.mxu0 %v193
    %392 = vmatprep.subr.mxu0 0.0
    %393 = vmatpush1.msra.mxu0 %v188
    %394 = vmatprep.subr.mxu0 0.0
    %395 = vmatpush1.msra.mxu0 %v183
    %396 = vmatprep.subr.mxu0 0.0
    %397 = vmatpush1.msra.mxu0 %v178
    %398 = vmatprep.subr.mxu0 0.0
    %399 = vmatpush1.msra.mxu0 %v173
    %400 = vmatprep.subr.mxu0 0.0
    %401 = vmatpush1.msra.mxu0 %v168
    %402 = vmatprep.subr.mxu0 0.0
    %403 = vmatpush2.msra.mxu0 0.0
    %404 = vmatprep.subr.mxu0 0.0
    %405 = vmatpush2.msra.mxu0 0.0
    %406 = vmatprep.subr.mxu0 0.0
    %407 = vmatpush2.msra.mxu0 0.0
    %408 = vmatprep.subr.mxu0 0.0
    %409 = vmatpush2.msra.mxu0 0.0
    %410 = vmatprep.subr.mxu0 0.0
    %411 = vmatpush2.msra.mxu0 0.0
    %412 = vmatprep.subr.mxu0 0.0
    %413 = vmatpush2.msra.mxu0 0.0
    %414 = vmatprep.subr.mxu0 0.0
    %415 = vmatpush2.msra.mxu0 0.0
    %416 = vmatprep.subr.mxu0 0.0
    %417 = vmatpush2.msra.mxu0 0.0
    %418 = vmatprep.subr.mxu0 0.0
    %419 = vmatpush2.msra.mxu0 0.0
    %420 = vmatprep.subr.mxu0 0.0
    %421 = vmatpush2.msra.mxu0 0.0
    %422 = vmatprep.subr.mxu0 0.0
    %423 = vmatpush2.msra.mxu0 0.0
    %424 = vmatprep.subr.mxu0 0.0
    %425 = vmatpush2.msra.mxu0 0.0
    %426 = vmatprep.subr.mxu0 0.0
    %427 = vmatpush2.msra.mxu0 0.0
    %428 = vmatprep.subr.mxu0 0.0
    %429 = vmatpush2.msra.mxu0 0.0
    %430 = vmatprep.subr.mxu0 0.0
    %431 = vmatpush2.msra.mxu0 0.0
    %432 = vmatprep.subr.mxu0 0.0
    %433 = vmatpush2.msra.mxu0 0.0
    %434 = vmatprep.mubr.f32.mxu0 0.0
    %435 = vmatmul.mubr.f32.gmra.mxu0 %v353
    %v436 = vpop.f32.mrf.mxu0
    %v437 = vadd.f32 0.0, %v436
    %v438 = vpop.f32.mrf.mxu0
    %439 = vmatprep.mubr.f32.mxu0 0.0
    %440 = vmatmul.mubr.f32.gmra.mxu0 %v356
    %v441 = vpop.f32.mrf.mxu0
    %v442 = vadd.f32 0.0, %v441
    %v443 = vpop.f32.mrf.mxu0
    %444 = vmatprep.mubr.f32.mxu0 0.0
    %445 = vmatmul.mubr.f32.gmra.mxu0 %v359
    %v446 = vpop.f32.mrf.mxu0
    %v447 = vadd.f32 0.0, %v446
    %v448 = vpop.f32.mrf.mxu0
    %449 = vmatprep.mubr.f32.mxu0 0.0
    %450 = vmatmul.mubr.f32.gmra.mxu0 %v362
    %v451 = vpop.f32.mrf.mxu0
    %v452 = vadd.f32 0.0, %v451
    %v453 = vpop.f32.mrf.mxu0
    %454 = vmatprep.mubr.f32.mxu0 0.0
    %455 = vmatmul.mubr.f32.gmra.mxu0 %v365
    %v456 = vpop.f32.mrf.mxu0
    %v457 = vadd.f32 0.0, %v456
    %v458 = vpop.f32.mrf.mxu0
    %459 = vmatprep.mubr.f32.mxu0 0.0
    %460 = vmatmul.mubr.f32.gmra.mxu0 %v368
    %v461 = vpop.f32.mrf.mxu0
    %v462 = vadd.f32 0.0, %v461
    %v463 = vpop.f32.mrf.mxu0
    %464 = vdwg.mxu0
    %v465 = vld [vmem:[%s5] sm:$0x1]
    %v467 = vlaneseq
    %v468 = vshrl.u32 %v467, 7
    %v469 = vsub.s32 0, %v468
    %v470 = vrot.slane %v465, %v469
    %v472 = vmul.f32 %v318, %v470
    %v473 = vmul.f32 %v323, %v470
    %v474 = vmul.f32 %v328, %v470
    %v475 = vmul.f32 %v333, %v470
    %v476 = vmul.f32 %v338, %v470
    %v477 = vmul.f32 %v343, %v470
    %v478 = vld [vmem:[%s6] sm:$0x1]
    %v480 = vlaneseq
    %v481 = vshrl.u32 %v480, 7
    %v482 = vsub.s32 0, %v481
    %v483 = vrot.slane %v478, %v482
    %v485 = vmul.f32 %v437, %v483
    %v486 = vmul.f32 %v442, %v483
    %v487 = vmul.f32 %v447, %v483
    %v488 = vmul.f32 %v452, %v483
    %v489 = vmul.f32 %v457, %v483
    %v490 = vmul.f32 %v462, %v483
    %v491 = vadd.f32 %v472, %v485
    %v492 = vadd.f32 %v473, %v486
    %v493 = vadd.f32 %v474, %v487
    %v494 = vadd.f32 %v475, %v488
    %v495 = vadd.f32 %v476, %v489
    %v496 = vadd.f32 %v477, %v490
    %v497 = vld [vmem:[%s7] sm:$0xff]
    %v498 = vld [vmem:[%s7 + $0x8] sm:$0xff]
    %v499 = vld [vmem:[%s7 + $0x10] sm:$0xff]
    %v500 = vld [vmem:[%s7 + $0x18] sm:$0xff]
    %v501 = vld [vmem:[%s7 + $0x20] sm:$0xff]
    %v502 = vld [vmem:[%s7 + $0x28] sm:$0xff]
    %vm503 = vcmask 392192
    %v505 = vsel %vm503, %v491, 0
    %v508 = vsel %vm503, %v492, 0
    %v511 = vsel %vm503, %v493, 0
    %v514 = vsel %vm503, %v494, 0
    %v517 = vsel %vm503, %v495, 0
    %v520 = vsel %vm503, %v496, 0
    %522 = vmatprep.subr.mxu0 0.0
    %523 = vmatpush1.msra.mxu0 0.0
    %524 = vmatprep.subr.mxu0 0.0
    %525 = vmatpush1.msra.mxu0 0.0
    %526 = vmatprep.subr.mxu0 0.0
    %527 = vmatpush1.msra.mxu0 0.0
    %528 = vmatprep.subr.mxu0 0.0
    %529 = vmatpush1.msra.mxu0 0.0
    %530 = vmatprep.subr.mxu0 0.0
    %531 = vmatpush1.msra.mxu0 0.0
    %532 = vmatprep.subr.mxu0 0.0
    %533 = vmatpush1.msra.mxu0 0.0
    %534 = vmatprep.subr.mxu0 0.0
    %535 = vmatpush1.msra.mxu0 0.0
    %536 = vmatprep.subr.mxu0 0.0
    %537 = vmatpush1.msra.mxu0 0.0
    %538 = vmatprep.subr.mxu0 0.0
    %539 = vmatpush1.msra.mxu0 0.0
    %540 = vmatprep.subr.mxu0 0.0
    %541 = vmatpush1.msra.mxu0 0.0
    %542 = vmatprep.subr.mxu0 0.0
    %543 = vmatpush1.msra.mxu0 %v502
    %544 = vmatprep.subr.mxu0 0.0
    %545 = vmatpush1.msra.mxu0 %v501
    %546 = vmatprep.subr.mxu0 0.0
    %547 = vmatpush1.msra.mxu0 %v500
    %548 = vmatprep.subr.mxu0 0.0
    %549 = vmatpush1.msra.mxu0 %v499
    %550 = vmatprep.subr.mxu0 0.0
    %551 = vmatpush1.msra.mxu0 %v498
    %552 = vmatprep.subr.mxu0 0.0
    %553 = vmatpush1.msra.mxu0 %v497
    %554 = vmatprep.subr.mxu0 0.0
    %555 = vmatpush2.msra.mxu0 0.0
    %556 = vmatprep.subr.mxu0 0.0
    %557 = vmatpush2.msra.mxu0 0.0
    %558 = vmatprep.subr.mxu0 0.0
    %559 = vmatpush2.msra.mxu0 0.0
    %560 = vmatprep.subr.mxu0 0.0
    %561 = vmatpush2.msra.mxu0 0.0
    %562 = vmatprep.subr.mxu0 0.0
    %563 = vmatpush2.msra.mxu0 0.0
    %564 = vmatprep.subr.mxu0 0.0
    %565 = vmatpush2.msra.mxu0 0.0
    %566 = vmatprep.subr.mxu0 0.0
    %567 = vmatpush2.msra.mxu0 0.0
    %568 = vmatprep.subr.mxu0 0.0
    %569 = vmatpush2.msra.mxu0 0.0
    %570 = vmatprep.subr.mxu0 0.0
    %571 = vmatpush2.msra.mxu0 0.0
    %572 = vmatprep.subr.mxu0 0.0
    %573 = vmatpush2.msra.mxu0 0.0
    %574 = vmatprep.subr.mxu0 0.0
    %575 = vmatpush2.msra.mxu0 0.0
    %576 = vmatprep.subr.mxu0 0.0
    %577 = vmatpush2.msra.mxu0 0.0
    %578 = vmatprep.subr.mxu0 0.0
    %579 = vmatpush2.msra.mxu0 0.0
    %580 = vmatprep.subr.mxu0 0.0
    %581 = vmatpush2.msra.mxu0 0.0
    %582 = vmatprep.subr.mxu0 0.0
    %583 = vmatpush2.msra.mxu0 0.0
    %584 = vmatprep.subr.mxu0 0.0
    %585 = vmatpush2.msra.mxu0 0.0
    %586 = vmatprep.mubr.f32.mxu0 0.0
    %587 = vmatmul.mubr.f32.gmra.mxu0 %v505
    %v588 = vpop.f32.mrf.mxu0
    %v589 = vadd.f32 0.0, %v588
    %v590 = vpop.f32.mrf.mxu0
    %591 = vmatprep.mubr.f32.mxu0 0.0
    %592 = vmatmul.mubr.f32.gmra.mxu0 %v508
    %v593 = vpop.f32.mrf.mxu0
    %v594 = vadd.f32 0.0, %v593
    %v595 = vpop.f32.mrf.mxu0
    %596 = vmatprep.mubr.f32.mxu0 0.0
    %597 = vmatmul.mubr.f32.gmra.mxu0 %v511
    %v598 = vpop.f32.mrf.mxu0
    %v599 = vadd.f32 0.0, %v598
    %v600 = vpop.f32.mrf.mxu0
    %601 = vmatprep.mubr.f32.mxu0 0.0
    %602 = vmatmul.mubr.f32.gmra.mxu0 %v514
    %v603 = vpop.f32.mrf.mxu0
    %v604 = vadd.f32 0.0, %v603
    %v605 = vpop.f32.mrf.mxu0
    %606 = vmatprep.mubr.f32.mxu0 0.0
    %607 = vmatmul.mubr.f32.gmra.mxu0 %v517
    %v608 = vpop.f32.mrf.mxu0
    %v609 = vadd.f32 0.0, %v608
    %v610 = vpop.f32.mrf.mxu0
    %611 = vmatprep.mubr.f32.mxu0 0.0
    %612 = vmatmul.mubr.f32.gmra.mxu0 %v520
    %v613 = vpop.f32.mrf.mxu0
    %v614 = vadd.f32 0.0, %v613
    %v615 = vpop.f32.mrf.mxu0
    %616 = vdwg.mxu0
    %vm617 = vcmp.gt.f32.partialorder %v589, 0.0
    %vm618 = vcmp.gt.f32.partialorder %v594, 0.0
    %vm619 = vcmp.gt.f32.partialorder %v599, 0.0
    %vm620 = vcmp.gt.f32.partialorder %v604, 0.0
    %vm621 = vcmp.gt.f32.partialorder %v609, 0.0
    %vm622 = vcmp.gt.f32.partialorder %v614, 0.0
    %v623 = vmul.f32 %v589, 0.2
    %v624 = vmul.f32 %v594, 0.2
    %v625 = vmul.f32 %v599, 0.2
    %v626 = vmul.f32 %v604, 0.2
    %v627 = vmul.f32 %v609, 0.2
    %v628 = vmul.f32 %v614, 0.2
    %v629 = vsel %vm617, %v589, %v623
    %v630 = vsel %vm618, %v594, %v624
    %v631 = vsel %vm619, %v599, %v625
    %v632 = vsel %vm620, %v604, %v626
    %v633 = vsel %vm621, %v609, %v627
    %v634 = vsel %vm622, %v614, %v628
    %v635 = vsel %vm503, %v629, -inf
    %v636 = vsel %vm503, %v630, -inf
    %v637 = vsel %vm503, %v631, -inf
    %v638 = vsel %vm503, %v632, -inf
    %v639 = vsel %vm503, %v633, -inf
    %v640 = vmax.f32 %v635, %v639
    %v641 = vsel %vm503, %v634, -inf
    %v642 = vmax.f32 %v636, %v641
    %v643 = vmax.f32 %v640, %v642
    %v644 = vmax.f32 %v637, %v638
    %v645 = vmax.f32 %v643, %v644
    %v646 = vrot.slane %v645, 4
    %v647 = vmax.f32 %v645, %v646
    %v648 = vrot.slane %v647, 2
    %v649 = vmax.f32 %v647, %v648
    %v650 = vrot.slane %v649, 1
    %v651 = vmax.f32 %v649, %v650
    %v652 = vsub.f32 %v629, %v651
    %v653 = vsub.f32 %v630, %v651
    %v654 = vsub.f32 %v631, %v651
    %v655 = vsub.f32 %v632, %v651
    %v656 = vsub.f32 %v633, %v651
    %v657 = vsub.f32 %v634, %v651
    %v658 = vmul.f32 %v652, 1.442695
    %v659 = vpow.pop %v658
    %v660 = vmul.f32 %v653, 1.442695
    %v661 = vpow.pop %v660
    %v662 = vmul.f32 %v654, 1.442695
    %v663 = vpow.pop %v662
    %v664 = vmul.f32 %v655, 1.442695
    %v665 = vpow.pop %v664
    %v666 = vmul.f32 %v656, 1.442695
    %v667 = vpow.pop %v666
    %v668 = vmul.f32 %v657, 1.442695
    %v669 = vpow.pop %v668
    %v670 = vld [vmem:[%s8] sm:$0xff]
    %v671 = vld [vmem:[%s8 + $0x8] sm:$0xff]
    %v672 = vld [vmem:[%s8 + $0x10] sm:$0xff]
    %v673 = vld [vmem:[%s8 + $0x18] sm:$0xff]
    %v674 = vld [vmem:[%s8 + $0x20] sm:$0xff]
    %v675 = vld [vmem:[%s8 + $0x28] sm:$0xff]
    %v677 = vsel %vm503, %v670, 0
    %v680 = vsel %vm503, %v671, 0
    %v683 = vsel %vm503, %v672, 0
    %v686 = vsel %vm503, %v673, 0
    %v689 = vsel %vm503, %v674, 0
    %v692 = vsel %vm503, %v675, 0
    %694 = vmatprep.subr.mxu0 0.0
    %695 = vmatpush1.msra.mxu0 0.0
    %696 = vmatprep.subr.mxu0 0.0
    %697 = vmatpush1.msra.mxu0 0.0
    %698 = vmatprep.subr.mxu0 0.0
    %699 = vmatpush1.msra.mxu0 0.0
    %700 = vmatprep.subr.mxu0 0.0
    %701 = vmatpush1.msra.mxu0 0.0
    %702 = vmatprep.subr.mxu0 0.0
    %703 = vmatpush1.msra.mxu0 0.0
    %704 = vmatprep.subr.mxu0 0.0
    %705 = vmatpush1.msra.mxu0 0.0
    %706 = vmatprep.subr.mxu0 0.0
    %707 = vmatpush1.msra.mxu0 0.0
    %708 = vmatprep.subr.mxu0 0.0
    %709 = vmatpush1.msra.mxu0 0.0
    %710 = vmatprep.subr.mxu0 0.0
    %711 = vmatpush1.msra.mxu0 0.0
    %712 = vmatprep.subr.mxu0 0.0
    %713 = vmatpush1.msra.mxu0 0.0
    %714 = vmatprep.subr.mxu0 0.0
    %715 = vmatpush1.msra.mxu0 %v669
    %716 = vmatprep.subr.mxu0 0.0
    %717 = vmatpush1.msra.mxu0 %v667
    %718 = vmatprep.subr.mxu0 0.0
    %719 = vmatpush1.msra.mxu0 %v665
    %720 = vmatprep.subr.mxu0 0.0
    %721 = vmatpush1.msra.mxu0 %v663
    %722 = vmatprep.subr.mxu0 0.0
    %723 = vmatpush1.msra.mxu0 %v661
    %724 = vmatprep.subr.mxu0 0.0
    %725 = vmatpush1.msra.mxu0 %v659
    %726 = vmatprep.subr.mxu0 0.0
    %727 = vmatpush2.msra.mxu0 0.0
    %728 = vmatprep.subr.mxu0 0.0
    %729 = vmatpush2.msra.mxu0 0.0
    %730 = vmatprep.subr.mxu0 0.0
    %731 = vmatpush2.msra.mxu0 0.0
    %732 = vmatprep.subr.mxu0 0.0
    %733 = vmatpush2.msra.mxu0 0.0
    %734 = vmatprep.subr.mxu0 0.0
    %735 = vmatpush2.msra.mxu0 0.0
    %736 = vmatprep.subr.mxu0 0.0
    %737 = vmatpush2.msra.mxu0 0.0
    %738 = vmatprep.subr.mxu0 0.0
    %739 = vmatpush2.msra.mxu0 0.0
    %740 = vmatprep.subr.mxu0 0.0
    %741 = vmatpush2.msra.mxu0 0.0
    %742 = vmatprep.subr.mxu0 0.0
    %743 = vmatpush2.msra.mxu0 0.0
    %744 = vmatprep.subr.mxu0 0.0
    %745 = vmatpush2.msra.mxu0 0.0
    %746 = vmatprep.subr.mxu0 0.0
    %747 = vmatpush2.msra.mxu0 0.0
    %748 = vmatprep.subr.mxu0 0.0
    %749 = vmatpush2.msra.mxu0 0.0
    %750 = vmatprep.subr.mxu0 0.0
    %751 = vmatpush2.msra.mxu0 0.0
    %752 = vmatprep.subr.mxu0 0.0
    %753 = vmatpush2.msra.mxu0 0.0
    %754 = vmatprep.subr.mxu0 0.0
    %755 = vmatpush2.msra.mxu0 0.0
    %756 = vmatprep.subr.mxu0 0.0
    %757 = vmatpush2.msra.mxu0 0.0
    %758 = vmatprep.mubr.f32.mxu0 0.0
    %759 = vmatmul.mubr.f32.gmra.mxu0 %v677
    %v760 = vpop.f32.mrf.mxu0
    %v761 = vadd.f32 1e-16, %v760
    %v762 = vpop.f32.mrf.mxu0
    %763 = vmatprep.mubr.f32.mxu0 0.0
    %764 = vmatmul.mubr.f32.gmra.mxu0 %v680
    %v765 = vpop.f32.mrf.mxu0
    %v766 = vadd.f32 1e-16, %v765
    %v767 = vpop.f32.mrf.mxu0
    %768 = vmatprep.mubr.f32.mxu0 0.0
    %769 = vmatmul.mubr.f32.gmra.mxu0 %v683
    %v770 = vpop.f32.mrf.mxu0
    %v771 = vadd.f32 1e-16, %v770
    %v772 = vpop.f32.mrf.mxu0
    %773 = vmatprep.mubr.f32.mxu0 0.0
    %774 = vmatmul.mubr.f32.gmra.mxu0 %v686
    %v775 = vpop.f32.mrf.mxu0
    %v776 = vadd.f32 1e-16, %v775
    %v777 = vpop.f32.mrf.mxu0
    %778 = vmatprep.mubr.f32.mxu0 0.0
    %779 = vmatmul.mubr.f32.gmra.mxu0 %v689
    %v780 = vpop.f32.mrf.mxu0
    %v781 = vadd.f32 1e-16, %v780
    %v782 = vpop.f32.mrf.mxu0
    %783 = vmatprep.mubr.f32.mxu0 0.0
    %784 = vmatmul.mubr.f32.gmra.mxu0 %v692
    %v785 = vpop.f32.mrf.mxu0
    %v786 = vadd.f32 1e-16, %v785
    %v787 = vpop.f32.mrf.mxu0
    %788 = vdwg.mxu0
    %v789 = vrcp.pop %v761
    %v790 = vmul.f32 %v659, %v789
    %v791 = vrcp.pop %v766
    %v792 = vmul.f32 %v661, %v791
    %v793 = vrcp.pop %v771
    %v794 = vmul.f32 %v663, %v793
    %v795 = vrcp.pop %v776
    %v796 = vmul.f32 %v665, %v795
    %v797 = vrcp.pop %v781
    %v798 = vmul.f32 %v667, %v797
    %v799 = vrcp.pop %v786
    %v800 = vmul.f32 %v669, %v799
    %v801 = vld [vmem:[%s9] sm:$0xff]
    %v802 = vld [vmem:[%s9 + $0x8] sm:$0xff]
    %v803 = vld [vmem:[%s9 + $0x10] sm:$0xff]
    %v804 = vld [vmem:[%s9 + $0x18] sm:$0xff]
    %v805 = vld [vmem:[%s9 + $0x20] sm:$0xff]
    %v806 = vld [vmem:[%s9 + $0x28] sm:$0xff]
    %v807 = vmul.f32 %v437, %v801
    %v808 = vmul.f32 %v442, %v802
    %v809 = vmul.f32 %v447, %v803
    %v810 = vmul.f32 %v452, %v804
    %v811 = vmul.f32 %v457, %v805
    %v812 = vmul.f32 %v462, %v806
    %v813 = vmul.f32 %v807, %v790
    %v814 = vmul.f32 %v808, %v792
    %v815 = vmul.f32 %v809, %v794
    %v816 = vmul.f32 %v810, %v796
    %v817 = vmul.f32 %v811, %v798
    %v818 = vmul.f32 %v812, %v800
    %v819 = vld [vmem:[%s4] sm:$0xff]
    %v820 = vld [vmem:[%s4 + $0x8] sm:$0xff]
    %v821 = vld [vmem:[%s4 + $0x10] sm:$0xff]
    %v822 = vld [vmem:[%s4 + $0x18] sm:$0xff]
    %v823 = vld [vmem:[%s4 + $0x20] sm:$0xff]
    %v824 = vld [vmem:[%s4 + $0x28] sm:$0xff]
    %v825 = vld [vmem:[%s4 + $0x30] sm:$0xff]
    %v826 = vld [vmem:[%s4 + $0x38] sm:$0xff]
    %v827 = vld [vmem:[%s4 + $0x40] sm:$0xff]
    %v828 = vld [vmem:[%s4 + $0x48] sm:$0xff]
    %v829 = vld [vmem:[%s4 + $0x50] sm:$0xff]
    %v830 = vld [vmem:[%s4 + $0x58] sm:$0xff]
    %v831 = vld [vmem:[%s10] sm:$0x1]
    %v833 = vlaneseq
    %v834 = vshrl.u32 %v833, 7
    %v835 = vsub.s32 0, %v834
    %v836 = vrot.slane %v831, %v835
    %v839 = vsel %vm503, %v819, 0
    %v842 = vsel %vm503, %v820, 0
    %v845 = vsel %vm503, %v821, 0
    %v848 = vsel %vm503, %v822, 0
    %v851 = vsel %vm503, %v823, 0
    %v854 = vsel %vm503, %v824, 0
    %v857 = vsel %vm503, %v825, 0
    %v860 = vsel %vm503, %v826, 0
    %v863 = vsel %vm503, %v827, 0
    %v866 = vsel %vm503, %v828, 0
    %v869 = vsel %vm503, %v829, 0
    %v872 = vsel %vm503, %v830, 0
    %874 = vmatprep.subr.mxu0 0.0
    %875 = vmatpush1.msra.mxu0 0.0
    %876 = vmatprep.subr.mxu0 0.0
    %877 = vmatpush1.msra.mxu0 0.0
    %878 = vmatprep.subr.mxu0 0.0
    %879 = vmatpush1.msra.mxu0 0.0
    %880 = vmatprep.subr.mxu0 0.0
    %881 = vmatpush1.msra.mxu0 0.0
    %882 = vmatprep.subr.mxu0 0.0
    %883 = vmatpush1.msra.mxu0 0.0
    %884 = vmatprep.subr.mxu0 0.0
    %885 = vmatpush1.msra.mxu0 0.0
    %886 = vmatprep.subr.mxu0 0.0
    %887 = vmatpush1.msra.mxu0 0.0
    %888 = vmatprep.subr.mxu0 0.0
    %889 = vmatpush1.msra.mxu0 0.0
    %890 = vmatprep.subr.mxu0 0.0
    %891 = vmatpush1.msra.mxu0 0.0
    %892 = vmatprep.subr.mxu0 0.0
    %893 = vmatpush1.msra.mxu0 0.0
    %894 = vmatprep.subr.mxu0 0.0
    %895 = vmatpush1.msra.mxu0 %v818
    %896 = vmatprep.subr.mxu0 0.0
    %897 = vmatpush1.msra.mxu0 %v817
    %898 = vmatprep.subr.mxu0 0.0
    %899 = vmatpush1.msra.mxu0 %v816
    %900 = vmatprep.subr.mxu0 0.0
    %901 = vmatpush1.msra.mxu0 %v815
    %902 = vmatprep.subr.mxu0 0.0
    %903 = vmatpush1.msra.mxu0 %v814
    %904 = vmatprep.subr.mxu0 0.0
    %905 = vmatpush1.msra.mxu0 %v813
    %906 = vmatprep.subr.mxu0 0.0
    %907 = vmatpush2.msra.mxu0 0.0
    %908 = vmatprep.subr.mxu0 0.0
    %909 = vmatpush2.msra.mxu0 0.0
    %910 = vmatprep.subr.mxu0 0.0
    %911 = vmatpush2.msra.mxu0 0.0
    %912 = vmatprep.subr.mxu0 0.0
    %913 = vmatpush2.msra.mxu0 0.0
    %914 = vmatprep.subr.mxu0 0.0
    %915 = vmatpush2.msra.mxu0 0.0
    %916 = vmatprep.subr.mxu0 0.0
    %917 = vmatpush2.msra.mxu0 0.0
    %918 = vmatprep.subr.mxu0 0.0
    %919 = vmatpush2.msra.mxu0 0.0
    %920 = vmatprep.subr.mxu0 0.0
    %921 = vmatpush2.msra.mxu0 0.0
    %922 = vmatprep.subr.mxu0 0.0
    %923 = vmatpush2.msra.mxu0 0.0
    %924 = vmatprep.subr.mxu0 0.0
    %925 = vmatpush2.msra.mxu0 0.0
    %926 = vmatprep.subr.mxu0 0.0
    %927 = vmatpush2.msra.mxu0 0.0
    %928 = vmatprep.subr.mxu0 0.0
    %929 = vmatpush2.msra.mxu0 0.0
    %930 = vmatprep.subr.mxu0 0.0
    %931 = vmatpush2.msra.mxu0 0.0
    %932 = vmatprep.subr.mxu0 0.0
    %933 = vmatpush2.msra.mxu0 0.0
    %934 = vmatprep.subr.mxu0 0.0
    %935 = vmatpush2.msra.mxu0 0.0
    %936 = vmatprep.subr.mxu0 0.0
    %937 = vmatpush2.msra.mxu0 0.0
    %938 = vmatprep.mubr.f32.mxu0 0.0
    %939 = vmatmul.mubr.f32.gmra.mxu0 %v839
    %v940 = vpop.f32.mrf.mxu0
    %v941 = vadd.f32 %v836, %v940
    %v942 = vpop.f32.mrf.mxu0
    %943 = vmatprep.mubr.f32.mxu0 0.0
    %944 = vmatmul.mubr.f32.gmra.mxu0 %v842
    %v945 = vpop.f32.mrf.mxu0
    %v946 = vadd.f32 %v836, %v945
    %v947 = vpop.f32.mrf.mxu0
    %948 = vmatprep.mubr.f32.mxu0 0.0
    %949 = vmatmul.mubr.f32.gmra.mxu0 %v845
    %v950 = vpop.f32.mrf.mxu0
    %v951 = vadd.f32 %v836, %v950
    %v952 = vpop.f32.mrf.mxu0
    %953 = vmatprep.mubr.f32.mxu0 0.0
    %954 = vmatmul.mubr.f32.gmra.mxu0 %v848
    %v955 = vpop.f32.mrf.mxu0
    %v956 = vadd.f32 %v836, %v955
    %v957 = vpop.f32.mrf.mxu0
    %958 = vmatprep.mubr.f32.mxu0 0.0
    %959 = vmatmul.mubr.f32.gmra.mxu0 %v851
    %v960 = vpop.f32.mrf.mxu0
    %v961 = vadd.f32 %v836, %v960
    %v962 = vpop.f32.mrf.mxu0
    %963 = vmatprep.mubr.f32.mxu0 0.0
    %964 = vmatmul.mubr.f32.gmra.mxu0 %v854
    %v965 = vpop.f32.mrf.mxu0
    %v966 = vadd.f32 %v836, %v965
    %v967 = vpop.f32.mrf.mxu0
    %968 = vmatprep.mubr.f32.mxu0 0.0
    %969 = vmatmul.mubr.f32.gmra.mxu0 %v857
    %v970 = vpop.f32.mrf.mxu0
    %v971 = vadd.f32 %v836, %v970
    %v972 = vpop.f32.mrf.mxu0
    %973 = vmatprep.mubr.f32.mxu0 0.0
    %974 = vmatmul.mubr.f32.gmra.mxu0 %v860
    %v975 = vpop.f32.mrf.mxu0
    %v976 = vadd.f32 %v836, %v975
    %v977 = vpop.f32.mrf.mxu0
    %978 = vmatprep.mubr.f32.mxu0 0.0
    %979 = vmatmul.mubr.f32.gmra.mxu0 %v863
    %v980 = vpop.f32.mrf.mxu0
    %v981 = vadd.f32 %v836, %v980
    %v982 = vpop.f32.mrf.mxu0
    %983 = vmatprep.mubr.f32.mxu0 0.0
    %984 = vmatmul.mubr.f32.gmra.mxu0 %v866
    %v985 = vpop.f32.mrf.mxu0
    %v986 = vadd.f32 %v836, %v985
    %v987 = vpop.f32.mrf.mxu0
    %988 = vmatprep.mubr.f32.mxu0 0.0
    %989 = vmatmul.mubr.f32.gmra.mxu0 %v869
    %v990 = vpop.f32.mrf.mxu0
    %v991 = vadd.f32 %v836, %v990
    %v992 = vpop.f32.mrf.mxu0
    %993 = vmatprep.mubr.f32.mxu0 0.0
    %994 = vmatmul.mubr.f32.gmra.mxu0 %v872
    %v995 = vpop.f32.mrf.mxu0
    %v996 = vadd.f32 %v836, %v995
    %v997 = vpop.f32.mrf.mxu0
    %998 = vdwg.mxu0
    %vm999 = vcmp.gt.f32.partialorder %v941, 0.0
    %vm1000 = vcmp.gt.f32.partialorder %v946, 0.0
    %vm1001 = vcmp.gt.f32.partialorder %v951, 0.0
    %vm1002 = vcmp.gt.f32.partialorder %v956, 0.0
    %vm1003 = vcmp.gt.f32.partialorder %v961, 0.0
    %vm1004 = vcmp.gt.f32.partialorder %v966, 0.0
    %vm1005 = vcmp.gt.f32.partialorder %v971, 0.0
    %vm1006 = vcmp.gt.f32.partialorder %v976, 0.0
    %vm1007 = vcmp.gt.f32.partialorder %v981, 0.0
    %vm1008 = vcmp.gt.f32.partialorder %v986, 0.0
    %vm1009 = vcmp.gt.f32.partialorder %v991, 0.0
    %vm1010 = vcmp.gt.f32.partialorder %v996, 0.0
    %v1011 = vmul.f32 %v941, 0.1
    %v1012 = vmul.f32 %v946, 0.1
    %v1013 = vmul.f32 %v951, 0.1
    %v1014 = vmul.f32 %v956, 0.1
    %v1015 = vmul.f32 %v961, 0.1
    %v1016 = vmul.f32 %v966, 0.1
    %v1017 = vmul.f32 %v971, 0.1
    %v1018 = vmul.f32 %v976, 0.1
    %v1019 = vmul.f32 %v981, 0.1
    %v1020 = vmul.f32 %v986, 0.1
    %v1021 = vmul.f32 %v991, 0.1
    %v1022 = vmul.f32 %v996, 0.1
    %v1023 = vsel %vm999, %v941, %v1011
    %v1024 = vsel %vm1000, %v946, %v1012
    %v1025 = vsel %vm1001, %v951, %v1013
    %v1026 = vsel %vm1002, %v956, %v1014
    %v1027 = vsel %vm1003, %v961, %v1015
    %v1028 = vsel %vm1004, %v966, %v1016
    %v1029 = vsel %vm1005, %v971, %v1017
    %v1030 = vsel %vm1006, %v976, %v1018
    %v1031 = vsel %vm1007, %v981, %v1019
    %v1032 = vsel %vm1008, %v986, %v1020
    %v1033 = vsel %vm1009, %v991, %v1021
    %v1034 = vsel %vm1010, %v996, %v1022
    %v1035 = vsel %vm503, %v1023, 0.0
    %v1036 = vsel %vm503, %v1024, 0.0
    %v1037 = vadd.f32 %v1035, %v1036
    %v1038 = vsel %vm503, %v1025, 0.0
    %v1039 = vadd.f32 %v1037, %v1038
    %v1040 = vsel %vm503, %v1026, 0.0
    %v1041 = vadd.f32 %v1039, %v1040
    %v1042 = vsel %vm503, %v1027, 0.0
    %v1043 = vadd.f32 %v1041, %v1042
    %v1044 = vsel %vm503, %v1028, 0.0
    %v1045 = vadd.f32 %v1043, %v1044
    %v1046 = vsel %vm503, %v1029, 0.0
    %v1047 = vadd.f32 %v1045, %v1046
    %v1048 = vsel %vm503, %v1030, 0.0
    %v1049 = vadd.f32 %v1047, %v1048
    %v1050 = vsel %vm503, %v1031, 0.0
    %v1051 = vadd.f32 %v1049, %v1050
    %v1052 = vsel %vm503, %v1032, 0.0
    %v1053 = vadd.f32 %v1051, %v1052
    %v1054 = vsel %vm503, %v1033, 0.0
    %v1055 = vadd.f32 %v1053, %v1054
    %v1056 = vsel %vm503, %v1034, 0.0
    %v1057 = vadd.f32 %v1055, %v1056
    %v1058 = vrot.slane %v1057, 4
    %v1059 = vadd.f32 %v1057, %v1058
    %v1060 = vrot.slane %v1059, 2
    %v1061 = vadd.f32 %v1059, %v1060
    %v1062 = vrot.slane %v1061, 1
    %v1063 = vadd.f32 %v1061, %v1062
    %v1064 = vrcp.pop 96.0
    %v1065 = vmul.f32 %v1063, %v1064
    %v1066 = vsub.f32 %v1023, %v1065
    %v1067 = vsub.f32 %v1024, %v1065
    %v1068 = vsub.f32 %v1025, %v1065
    %v1069 = vsub.f32 %v1026, %v1065
    %v1070 = vsub.f32 %v1027, %v1065
    %v1071 = vsub.f32 %v1028, %v1065
    %v1072 = vsub.f32 %v1029, %v1065
    %v1073 = vsub.f32 %v1030, %v1065
    %v1074 = vsub.f32 %v1031, %v1065
    %v1075 = vsub.f32 %v1032, %v1065
    %v1076 = vsub.f32 %v1033, %v1065
    %v1077 = vsub.f32 %v1034, %v1065
    %v1078 = vmul.f32 %v1066, %v1066
    %v1079 = vmul.f32 %v1067, %v1067
    %v1080 = vmul.f32 %v1068, %v1068
    %v1081 = vmul.f32 %v1069, %v1069
    %v1082 = vmul.f32 %v1070, %v1070
    %v1083 = vmul.f32 %v1071, %v1071
    %v1084 = vmul.f32 %v1072, %v1072
    %v1085 = vmul.f32 %v1073, %v1073
    %v1086 = vmul.f32 %v1074, %v1074
    %v1087 = vmul.f32 %v1075, %v1075
    %v1088 = vmul.f32 %v1076, %v1076
    %v1089 = vmul.f32 %v1077, %v1077
    %v1090 = vsel %vm503, %v1078, 0.0
    %v1091 = vsel %vm503, %v1079, 0.0
    %v1092 = vadd.f32 %v1090, %v1091
    %v1093 = vsel %vm503, %v1080, 0.0
    %v1094 = vadd.f32 %v1092, %v1093
    %v1095 = vsel %vm503, %v1081, 0.0
    %v1096 = vadd.f32 %v1094, %v1095
    %v1097 = vsel %vm503, %v1082, 0.0
    %v1098 = vadd.f32 %v1096, %v1097
    %v1099 = vsel %vm503, %v1083, 0.0
    %v1100 = vadd.f32 %v1098, %v1099
    %v1101 = vsel %vm503, %v1084, 0.0
    %v1102 = vadd.f32 %v1100, %v1101
    %v1103 = vsel %vm503, %v1085, 0.0
    %v1104 = vadd.f32 %v1102, %v1103
    %v1105 = vsel %vm503, %v1086, 0.0
    %v1106 = vadd.f32 %v1104, %v1105
    %v1107 = vsel %vm503, %v1087, 0.0
    %v1108 = vadd.f32 %v1106, %v1107
    %v1109 = vsel %vm503, %v1088, 0.0
    %v1110 = vadd.f32 %v1108, %v1109
    %v1111 = vsel %vm503, %v1089, 0.0
    %v1112 = vadd.f32 %v1110, %v1111
    %v1113 = vrot.slane %v1112, 4
    %v1114 = vadd.f32 %v1112, %v1113
    %v1115 = vrot.slane %v1114, 2
    %v1116 = vadd.f32 %v1114, %v1115
    %v1117 = vrot.slane %v1116, 1
    %v1118 = vadd.f32 %v1116, %v1117
    %v1119 = vmul.f32 %v1118, %v1064
    %v1120 = vadd.f32 %v1119, 1e-05
    %v1121 = vrsqrt.pop %v1120
    %v1122 = vmul.f32 %v1066, %v1121
    %v1123 = vmul.f32 %v1067, %v1121
    %v1124 = vmul.f32 %v1068, %v1121
    %v1125 = vmul.f32 %v1069, %v1121
    %v1126 = vmul.f32 %v1070, %v1121
    %v1127 = vmul.f32 %v1071, %v1121
    %v1128 = vmul.f32 %v1072, %v1121
    %v1129 = vmul.f32 %v1073, %v1121
    %v1130 = vmul.f32 %v1074, %v1121
    %v1131 = vmul.f32 %v1075, %v1121
    %v1132 = vmul.f32 %v1076, %v1121
    %v1133 = vmul.f32 %v1077, %v1121
    %v1134 = vld [vmem:[%s11] sm:$0x1]
    %v1136 = vlaneseq
    %v1137 = vshrl.u32 %v1136, 7
    %v1138 = vsub.s32 0, %v1137
    %v1139 = vrot.slane %v1134, %v1138
    %v1141 = vmul.f32 %v1122, %v1139
    %v1142 = vmul.f32 %v1123, %v1139
    %v1143 = vmul.f32 %v1124, %v1139
    %v1144 = vmul.f32 %v1125, %v1139
    %v1145 = vmul.f32 %v1126, %v1139
    %v1146 = vmul.f32 %v1127, %v1139
    %v1147 = vmul.f32 %v1128, %v1139
    %v1148 = vmul.f32 %v1129, %v1139
    %v1149 = vmul.f32 %v1130, %v1139
    %v1150 = vmul.f32 %v1131, %v1139
    %v1151 = vmul.f32 %v1132, %v1139
    %v1152 = vmul.f32 %v1133, %v1139
    %v1153 = vld [vmem:[%s12] sm:$0x1]
    %v1155 = vlaneseq
    %v1156 = vshrl.u32 %v1155, 7
    %v1157 = vsub.s32 0, %v1156
    %v1158 = vrot.slane %v1153, %v1157
    %v1160 = vadd.f32 %v1141, %v1158
    %v1161 = vadd.f32 %v1142, %v1158
    %v1162 = vadd.f32 %v1143, %v1158
    %v1163 = vadd.f32 %v1144, %v1158
    %v1164 = vadd.f32 %v1145, %v1158
    %v1165 = vadd.f32 %v1146, %v1158
    %v1166 = vadd.f32 %v1147, %v1158
    %v1167 = vadd.f32 %v1148, %v1158
    %v1168 = vadd.f32 %v1149, %v1158
    %v1169 = vadd.f32 %v1150, %v1158
    %v1170 = vadd.f32 %v1151, %v1158
    %v1171 = vadd.f32 %v1152, %v1158
    %v1172 = vld [vmem:[%s13] sm:$0xff]
    %v1173 = vld [vmem:[%s13 + $0x8] sm:$0xff]
    %v1174 = vld [vmem:[%s13 + $0x10] sm:$0xff]
    %v1175 = vld [vmem:[%s13 + $0x18] sm:$0xff]
    %v1177 = vsel %vm232, %v1172, 0
    %v1180 = vsel %vm232, %v1173, 0
    %v1183 = vsel %vm232, %v1174, 0
    %v1186 = vsel %vm232, %v1175, 0
    %1188 = vmatprep.subr.mxu0 0.0
    %1189 = vmatpush1.msra.mxu0 0.0
    %1190 = vmatprep.subr.mxu0 0.0
    %1191 = vmatpush1.msra.mxu0 0.0
    %1192 = vmatprep.subr.mxu0 0.0
    %1193 = vmatpush1.msra.mxu0 0.0
    %1194 = vmatprep.subr.mxu0 0.0
    %1195 = vmatpush1.msra.mxu0 0.0
    %1196 = vmatprep.subr.mxu0 0.0
    %1197 = vmatpush1.msra.mxu0 %v1171
    %1198 = vmatprep.subr.mxu0 0.0
    %1199 = vmatpush1.msra.mxu0 %v1170
    %1200 = vmatprep.subr.mxu0 0.0
    %1201 = vmatpush1.msra.mxu0 %v1169
    %1202 = vmatprep.subr.mxu0 0.0
    %1203 = vmatpush1.msra.mxu0 %v1168
    %1204 = vmatprep.subr.mxu0 0.0
    %1205 = vmatpush1.msra.mxu0 %v1167
    %1206 = vmatprep.subr.mxu0 0.0
    %1207 = vmatpush1.msra.mxu0 %v1166
    %1208 = vmatprep.subr.mxu0 0.0
    %1209 = vmatpush1.msra.mxu0 %v1165
    %1210 = vmatprep.subr.mxu0 0.0
    %1211 = vmatpush1.msra.mxu0 %v1164
    %1212 = vmatprep.subr.mxu0 0.0
    %1213 = vmatpush1.msra.mxu0 %v1163
    %1214 = vmatprep.subr.mxu0 0.0
    %1215 = vmatpush1.msra.mxu0 %v1162
    %1216 = vmatprep.subr.mxu0 0.0
    %1217 = vmatpush1.msra.mxu0 %v1161
    %1218 = vmatprep.subr.mxu0 0.0
    %1219 = vmatpush1.msra.mxu0 %v1160
    %1220 = vmatprep.subr.mxu0 0.0
    %1221 = vmatpush2.msra.mxu0 0.0
    %1222 = vmatprep.subr.mxu0 0.0
    %1223 = vmatpush2.msra.mxu0 0.0
    %1224 = vmatprep.subr.mxu0 0.0
    %1225 = vmatpush2.msra.mxu0 0.0
    %1226 = vmatprep.subr.mxu0 0.0
    %1227 = vmatpush2.msra.mxu0 0.0
    %1228 = vmatprep.subr.mxu0 0.0
    %1229 = vmatpush2.msra.mxu0 0.0
    %1230 = vmatprep.subr.mxu0 0.0
    %1231 = vmatpush2.msra.mxu0 0.0
    %1232 = vmatprep.subr.mxu0 0.0
    %1233 = vmatpush2.msra.mxu0 0.0
    %1234 = vmatprep.subr.mxu0 0.0
    %1235 = vmatpush2.msra.mxu0 0.0
    %1236 = vmatprep.subr.mxu0 0.0
    %1237 = vmatpush2.msra.mxu0 0.0
    %1238 = vmatprep.subr.mxu0 0.0
    %1239 = vmatpush2.msra.mxu0 0.0
    %1240 = vmatprep.subr.mxu0 0.0
    %1241 = vmatpush2.msra.mxu0 0.0
    %1242 = vmatprep.subr.mxu0 0.0
    %1243 = vmatpush2.msra.mxu0 0.0
    %1244 = vmatprep.subr.mxu0 0.0
    %1245 = vmatpush2.msra.mxu0 0.0
    %1246 = vmatprep.subr.mxu0 0.0
    %1247 = vmatpush2.msra.mxu0 0.0
    %1248 = vmatprep.subr.mxu0 0.0
    %1249 = vmatpush2.msra.mxu0 0.0
    %1250 = vmatprep.subr.mxu0 0.0
    %1251 = vmatpush2.msra.mxu0 0.0
    %1252 = vmatprep.mubr.f32.mxu0 0.0
    %1253 = vmatmul.mubr.f32.gmra.mxu0 %v1177
    %v1254 = vpop.f32.mrf.mxu0
    %v1255 = vadd.f32 0.0, %v1254
    %v1256 = vpop.f32.mrf.mxu0
    %1257 = vmatprep.mubr.f32.mxu0 0.0
    %1258 = vmatmul.mubr.f32.gmra.mxu0 %v1180
    %v1259 = vpop.f32.mrf.mxu0
    %v1260 = vadd.f32 0.0, %v1259
    %v1261 = vpop.f32.mrf.mxu0
    %1262 = vmatprep.mubr.f32.mxu0 0.0
    %1263 = vmatmul.mubr.f32.gmra.mxu0 %v1183
    %v1264 = vpop.f32.mrf.mxu0
    %v1265 = vadd.f32 0.0, %v1264
    %v1266 = vpop.f32.mrf.mxu0
    %1267 = vmatprep.mubr.f32.mxu0 0.0
    %1268 = vmatmul.mubr.f32.gmra.mxu0 %v1186
    %v1269 = vpop.f32.mrf.mxu0
    %v1270 = vadd.f32 0.0, %v1269
    %v1271 = vpop.f32.mrf.mxu0
    %1272 = vdwg.mxu0
    %1273 = vst.msk [vmem:[#allocation2] sm:$0xff] %vm503, %v1255
    %1274 = vst.msk [vmem:[#allocation2 + $0x8] sm:$0xff] %vm503, %v1260
    %1275 = vst.msk [vmem:[#allocation2 + $0x10] sm:$0xff] %vm503, %v1265
    %1276 = vst.msk [vmem:[#allocation2 + $0x18] sm:$0xff] %vm503, %v1270
    // Predicated region
    $region58: #{traverse_subgnn_forward.1} parent=1 // pred_check
      _
    $region59: #{traverse_subgnn_forward.1} parent=1 // pred_check_branch
      %1278 = sbr.rel (0) target = $region61
    $region60: #{traverse_subgnn_forward.1} parent=1 // pred_region
      %s1280 = ssub.s32 512, 512
      %1281 = vsyncadd [#allocation3], %s1280
      %s1282 = sshll.u32 [#allocation2], 4
      %s1283 = int_to_ptr.vmem [resolvable:$true] %s1282
      %1288 = dma.vmem_to_hbm [thread:$0]  %s1283, 512, %s14, [#allocation3], 128, 128, 8
    $region61: #{traverse_subgnn_forward.1} parent=1 // pred_fallthru
      _
    // Predicated region
    $region62: #{traverse_subgnn_forward.1} parent=1 // pred_check
      _
    $region63: #{traverse_subgnn_forward.1} parent=1 // pred_check_branch
      %1290 = sbr.rel (0) target = $region65
    $region64: #{traverse_subgnn_forward.1} parent=1 // pred_region
      %1291 = dma.done [#allocation3], 512
    $region65: #{traverse_subgnn_forward.1} parent=1 // pred_fallthru
      _
    %1292 = vsyncpa [#allocation3], 1

</llo_original>
